<compile_context>
chip_gen: v5e
topology: v5e:2x2
jax: 0.10.0
libtpu: 0.0.40
codegen_flags: <defaults>
</compile_context>

<pallas_src>
import jax
import jax.numpy as jnp
import numpy as np
from jax.experimental import pallas as pl
from jax.experimental.pallas import tpu as pltpu

C_IN = 21     # conv1 in_channels
C_CONV = 32   # conv1 out_channels / lstm input_size
HID = 64      # lstm hidden_size


# ------------------------------ fused Pallas kernel -----------------------------------

def conv_lstm_fused_kernel(xw_ref, wc_ref, bc_ref,
                           wih0_ref, b0_ref,
                           w1cat_ref, whh1_ref, b1_ref,
                           wfc_ref, bfc_ref,
                           o_ref, xp_ref):
    """One batch-block of: im2col-Conv1d + ReLU -> 2-layer LSTM over T steps -> Linear(64->1).

    xw_ref   : (1, T, bt, 63)  im2col'd, time-major inputs for this batch block
    wc_ref   : (63, 32) stacked conv taps,  bc_ref: (1, 32)
    wih0_ref : (32, 4H),  b0_ref: (1, 4H)        (gate order f,i,o,g; b = b_ih + b_hh)
    w1cat_ref: (H, 8H) = [W_hh0 | W_ih1],  whh1_ref: (H, 4H),  b1_ref: (1, 4H)
    wfc_ref  : (1, H),  bfc_ref: (1, 1)
    o_ref    : (1, bt, 1)
    xp_ref   : (T, bt, 4H) VMEM scratch holding the hoisted layer-0 input projection
    """
    _, T, bt, CK = xw_ref.shape
    H = HID
    G = 4 * H

    # ---- prologue: single im2col conv matmul + ReLU + hoisted layer-0 input projection ----
    xw = xw_ref[...].reshape(T * bt, CK)                                  # t-major rows
    conv = jnp.maximum(
        jnp.dot(xw, wc_ref[...], preferred_element_type=jnp.float32) + bc_ref[...], 0.0)
    xpf = jnp.dot(conv, wih0_ref[...], preferred_element_type=jnp.float32) + b0_ref[...]
    xp_ref[...] = xpf.reshape(T, bt, G)   # stage in VMEM; per-step reads are leading-axis vlds

    # ---- hoisted loop invariants (bias broadcast, gate scale/offset constants) ----
    b1b = jnp.broadcast_to(b1_ref[...], (bt, G))
    col = jax.lax.broadcasted_iota(jnp.int32, (bt, G), 1)
    is_g = col >= 3 * H                    # gate order f,i,o,g -> plain-tanh "g" gate is last
    g_mul = jnp.where(is_g, 1.0, 0.5).astype(jnp.float32)
    g_off = jnp.where(is_g, 0.0, 0.5).astype(jnp.float32)

    def gate_act(z):
        # f,i,o: sigmoid(x) = 0.5 + 0.5*tanh(x/2);  g: tanh(x)  -> ONE wide EUP tanh per cell.
        return g_off + g_mul * jnp.tanh(z * g_mul)

    def cell(act, c):
        # Gate order f,i,o,g: f (lanes 0:64) and o (128:192) are lane-aligned with the 64-lane
        # c/h state; i (64:128) and g (192:256) are mutually aligned in the high halves, so the
        # only cross-lane move per cell is aligning i*g with f*c for the add.
        f = act[:, 0:H]
        i = act[:, H:2 * H]
        o = act[:, 2 * H:3 * H]
        g = act[:, 3 * H:4 * H]
        c_new = f * c + i * g
        h_new = o * jnp.tanh(c_new)
        return h_new, c_new

    # ---- 2-layer LSTM, fully unrolled over time (T is small & static) ----
    zc = jnp.zeros((bt, H), jnp.float32)
    zg = jnp.zeros((bt, G), jnp.float32)
    c0, c1, h1 = zc, zc, zc
    rec0, rec1 = zg, zg                    # h0_{t-1} @ W_hh0 ; h1_{t-1} @ W_hh1
    for t in range(T):
        # layer 0: input projection pre-hoisted, recurrence computed last step -> no matmul here
        h0, c0 = cell(gate_act(xp_ref[t] + rec0), c0)
        # layer 1: single MXU push gives [h0 @ W_hh0 | h0 @ W_ih1]; rec0 columns first so the
        # next step's critical-path operand pops first from the MRF (v5e/v6e).
        r1 = jnp.dot(h0, w1cat_ref[...], preferred_element_type=jnp.float32)   # (bt, 8H)
        h1, c1 = cell(gate_act(r1[:, G:2 * G] + rec1 + b1b), c1)
        if t + 1 < T:
            rec0 = r1[:, 0:G]              # h0_t @ W_hh0 for the next step
            rec1 = jnp.dot(h1, whh1_ref[...], preferred_element_type=jnp.float32)

    # ---- final Linear(64->1) on the last top-layer hidden: VPU mul + lane reduce ----
    y = jnp.sum(h1 * wfc_ref[...], axis=1, keepdims=True) + bfc_ref[...]
    o_ref[...] = y.reshape(1, bt, 1)


# ------------------------------------ wrapper ------------------------------------------

def _pick_batch_tile(B):
    """Split the batch across TensorCores only where it helps (v7x has 2 TCs/chip)."""
    try:
        kind = jax.devices()[0].device_kind.lower()
    except Exception:  # pragma: no cover - no device info
        kind = ""
    n_par = 2 if ("v7" in kind or "tpu7" in kind) else 1
    bt = B // n_par if (n_par > 1 and B % n_par == 0) else B
    # Keep the per-block working set comfortable on every generation (v7x has 64 MiB VMEM).
    while bt > 128 and bt % 2 == 0:
        bt //= 2
    return bt


def conv_lstm_forward(x, kp, *, b_tile=None):
    """Equivalent of ConvLSTM.forward. x: (B, T, 21) -> (B, 1). Single fused pallas_call."""
    B, T, Cin = x.shape
    assert Cin == C_IN
    bt = _pick_batch_tile(B) if b_tile is None else int(b_tile)
    assert B % bt == 0, "batch tile must divide the batch"
    nb = B // bt
    CK = 3 * C_IN
    G = 4 * HID

    # Host-side im2col (k=3, pad=1), laid out (nb, T, bt, 63) so blocks are time-major inside.
    x_pad = jnp.pad(x, ((0, 0), (1, 1), (0, 0)))
    xw = jnp.concatenate([x_pad[:, 0:T], x_pad[:, 1:T + 1], x_pad[:, 2:T + 2]], axis=-1)
    xw = xw.reshape(nb, bt, T, CK).transpose(0, 2, 1, 3)

    weights = (kp["conv_w"], kp["conv_b"], kp["wih0"], kp["b0"],
               kp["w1cat"], kp["whh1"], kp["b1"], kp["wfc"], kp["bfc"])

    def full_spec(arr):
        nd = arr.ndim
        return pl.BlockSpec(arr.shape, lambda i, _nd=nd: (0,) * _nd)

    out = pl.pallas_call(
        conv_lstm_fused_kernel,
        out_shape=jax.ShapeDtypeStruct((nb, bt, 1), jnp.float32),
        grid=(nb,),
        in_specs=[pl.BlockSpec((1, T, bt, CK), lambda i: (i, 0, 0, 0))]
                 + [full_spec(w) for w in weights],
        out_specs=pl.BlockSpec((1, bt, 1), lambda i: (i, 0, 0)),
        scratch_shapes=[pltpu.VMEM((T, bt, G), jnp.float32)],
        compiler_params=pltpu.CompilerParams(dimension_semantics=("parallel",)),
    )(xw, *weights)
    return out.reshape(B, 1)


# ------------------------------ parameter construction ---------------------------------

def init_params(key):
    """Torch-equivalent parameters (already transposed for right-multiplication)."""
    ks = jax.random.split(key, 12)

    def u(k, shape, fan):
        bound = 1.0 / np.sqrt(fan)
        return jax.random.uniform(k, shape, jnp.float32, -bound, bound)

    # Conv1d(21 -> 32, k=3): torch weight (32, 21, 3) -> kernel layout (3, 21, 32)
    conv_w_t = u(ks[0], (C_CONV, C_IN, 3), C_IN * 3)
    conv_w = jnp.transpose(conv_w_t, (2, 1, 0))               # (3, Cin, Cout)
    conv_b = u(ks[1], (1, C_CONV), C_IN * 3)

    # LSTM layer 0: torch W_ih (256, 32), W_hh (256, 64) -> transposed for x @ W (gates i,f,g,o)
    wih0 = jnp.transpose(u(ks[2], (4 * HID, C_CONV), HID))    # (32, 256)
    whh0 = jnp.transpose(u(ks[3], (4 * HID, HID), HID))       # (64, 256)
    b0 = (u(ks[4], (1, 4 * HID), HID) + u(ks[5], (1, 4 * HID), HID))

    # LSTM layer 1
    wih1 = jnp.transpose(u(ks[6], (4 * HID, HID), HID))       # (64, 256)
    whh1 = jnp.transpose(u(ks[7], (4 * HID, HID), HID))       # (64, 256)
    b1 = (u(ks[8], (1, 4 * HID), HID) + u(ks[9], (1, 4 * HID), HID))

    # Linear(64 -> 1): torch weight (1, 64) -> (64, 1)
    wfc = jnp.transpose(u(ks[10], (1, HID), HID))              # (64, 1)
    bfc = u(ks[11], (1, 1), HID)

    return dict(conv_w=conv_w, conv_b=conv_b,
                wih0=wih0, whh0=whh0, b0=b0,
                wih1=wih1, whh1=whh1, b1=b1,
                wfc=wfc, bfc=bfc)


def reorder_gates(w):
    """Permute torch gate columns [i,f,g,o] -> kernel layout [f,i,o,g] (last axis = 4H)."""
    H = HID
    i, f, g, o = w[..., 0:H], w[..., H:2 * H], w[..., 2 * H:3 * H], w[..., 3 * H:4 * H]
    return jnp.concatenate([f, i, o, g], axis=-1)


def prepare_kernel_params(p):
    """One-time host-side repack for the fused kernel."""
    return dict(
        conv_w=p["conv_w"].reshape(3 * C_IN, C_CONV),                 # im2col-stacked (63, 32)
        conv_b=p["conv_b"],
        wih0=reorder_gates(p["wih0"]),
        b0=reorder_gates(p["b0"]),
        # rec0 columns FIRST so the critical recurrence pops first from the MRF on v5e/v6e.
        w1cat=jnp.concatenate([reorder_gates(p["whh0"]),
                               reorder_gates(p["wih1"])], axis=1),    # (64, 512)
        whh1=reorder_gates(p["whh1"]),
        b1=reorder_gates(p["b1"]),
        wfc=jnp.transpose(p["wfc"]),                                  # (1, 64) row for VPU reduce
        bfc=p["bfc"],
    )


# ------------------------------ pure-JAX reference --------------------------------------

def reference_forward(x, p):
    B, T, _ = x.shape
    x_pad = jnp.pad(x, ((0, 0), (1, 1), (0, 0)))
    conv = jnp.zeros((B, T, C_CONV), jnp.float32)
    for k in range(3):
        conv = conv + jnp.einsum("btc,co->bto", x_pad[:, k:k + T, :], p["conv_w"][k])
    conv = jnp.maximum(conv + p["conv_b"][None, :, :], 0.0)

    def cell(x_t, h, c, wih, whh, b):
        g = x_t @ wih + h @ whh + b
        i, f, gg, o = (jax.nn.sigmoid(g[:, :HID]),
                       jax.nn.sigmoid(g[:, HID:2 * HID]),
                       jnp.tanh(g[:, 2 * HID:3 * HID]),
                       jax.nn.sigmoid(g[:, 3 * HID:]))
        c = f * c + i * gg
        return o * jnp.tanh(c), c

    z = jnp.zeros((B, HID), jnp.float32)
    h0, c0, h1, c1 = z, z, z, z
    for t in range(T):
        h0, c0 = cell(conv[:, t, :], h0, c0, p["wih0"], p["whh0"], p["b0"])
        h1, c1 = cell(h0, h1, c1, p["wih1"], p["whh1"], p["b1"])
    return h1 @ p["wfc"] + p["bfc"]


# ----------------------------------------- main -----------------------------------------

if __name__ == "__main__":
    key = jax.random.PRNGKey(0)
    k_x, k_p, k_x2 = jax.random.split(key, 3)

    params = init_params(k_p)
    kparams = prepare_kernel_params(params)

    # Shapes implied by the module: (batch, seq, features=21)
    B, T = 2, 8
    x = jax.random.normal(k_x, (B, T, C_IN), jnp.float32)

    y = jax.jit(conv_lstm_forward)(x, kparams)
    y = jax.block_until_ready(y)
    y_ref = reference_forward(x, params)
    assert y.shape == (B, 1)
    np.testing.assert_allclose(np.asarray(y), np.asarray(y_ref), rtol=2e-3, atol=2e-3)

    # Also exercise the multi-block batch-grid path (parallel across TCs on v7x) on any device.
    B2 = 8
    x2 = jax.random.normal(k_x2, (B2, T, C_IN), jnp.float32)
    y2 = jax.block_until_ready(jax.jit(lambda a: conv_lstm_forward(a, kparams, b_tile=4))(x2))
    y2_ref = reference_forward(x2, params)
    np.testing.assert_allclose(np.asarray(y2), np.asarray(y2_ref), rtol=2e-3, atol=2e-3)

    print("KERNEL_OK")
</pallas_src>

<mosaic_0001>
module attributes {stable_mosaic.version = 11 : i64} {
  func.func @conv_lstm_fused_kernel(%arg0: i32, %arg1: memref<1x8x2x63xf32, #tpu.memory_space<vmem>>, %arg2: memref<63x32xf32, #tpu.memory_space<vmem>>, %arg3: memref<1x32xf32, #tpu.memory_space<vmem>>, %arg4: memref<32x256xf32, #tpu.memory_space<vmem>>, %arg5: memref<1x256xf32, #tpu.memory_space<vmem>>, %arg6: memref<64x512xf32, #tpu.memory_space<vmem>>, %arg7: memref<64x256xf32, #tpu.memory_space<vmem>>, %arg8: memref<1x256xf32, #tpu.memory_space<vmem>>, %arg9: memref<1x64xf32, #tpu.memory_space<vmem>>, %arg10: memref<1x1xf32, #tpu.memory_space<vmem>>, %arg11: memref<1x2x1xf32, #tpu.memory_space<vmem>>, %arg12: memref<8x2x256xf32, #tpu.memory_space<vmem>>) attributes {dimension_semantics = [#tpu.dimension_semantics<parallel>], iteration_bounds = array<i64: 1>, scalar_prefetch = 0 : i64, scratch_operands = 1 : i64, tpu.core_type = #tpu.core_type<tc>, window_params = [{transform_indices = @transform_0, window_bounds = array<i64: 1, 8, 2, 63>}, {pipeline_mode = #tpu.pipeline_mode<synchronous>, transform_indices = @transform_1, window_bounds = array<i64: 63, 32>}, {pipeline_mode = #tpu.pipeline_mode<synchronous>, transform_indices = @transform_2, window_bounds = array<i64: 1, 32>}, {pipeline_mode = #tpu.pipeline_mode<synchronous>, transform_indices = @transform_3, window_bounds = array<i64: 32, 256>}, {pipeline_mode = #tpu.pipeline_mode<synchronous>, transform_indices = @transform_4, window_bounds = array<i64: 1, 256>}, {pipeline_mode = #tpu.pipeline_mode<synchronous>, transform_indices = @transform_5, window_bounds = array<i64: 64, 512>}, {pipeline_mode = #tpu.pipeline_mode<synchronous>, transform_indices = @transform_6, window_bounds = array<i64: 64, 256>}, {pipeline_mode = #tpu.pipeline_mode<synchronous>, transform_indices = @transform_7, window_bounds = array<i64: 1, 256>}, {pipeline_mode = #tpu.pipeline_mode<synchronous>, transform_indices = @transform_8, window_bounds = array<i64: 1, 64>}, {pipeline_mode = #tpu.pipeline_mode<synchronous>, transform_indices = @transform_9, window_bounds = array<i64: 1, 1>}, {transform_indices = @transform_10, window_bounds = array<i64: 1, 2, 1>}]} {
    %c0 = arith.constant 0 : index
    %c0_0 = arith.constant 0 : index
    %c0_1 = arith.constant 0 : index
    %c0_2 = arith.constant 0 : index
    %0 = vector.load %arg1[%c0, %c0_0, %c0_1, %c0_2] : memref<1x8x2x63xf32, #tpu.memory_space<vmem>>, vector<1x8x2x63xf32>
    %1 = vector.shape_cast %0 : vector<1x8x2x63xf32> to vector<16x63xf32>
    %c0_3 = arith.constant 0 : index
    %c0_4 = arith.constant 0 : index
    %2 = vector.load %arg2[%c0_3, %c0_4] : memref<63x32xf32, #tpu.memory_space<vmem>>, vector<63x32xf32>
    %cst = arith.constant dense<0.000000e+00> : vector<16x32xf32>
    %3 = tpu.matmul %1, %2, %cst {dimension_numbers = #tpu.dot_dimension_numbers<[1], [0], [0], [1], [0, 0, 1, 1], [], []>} : vector<16x63xf32>, vector<63x32xf32>, vector<16x32xf32> -> vector<16x32xf32>
    %c0_5 = arith.constant 0 : index
    %c0_6 = arith.constant 0 : index
    %4 = vector.load %arg3[%c0_5, %c0_6] : memref<1x32xf32, #tpu.memory_space<vmem>>, vector<1x32xf32>
    %5 = vector.broadcast %4 : vector<1x32xf32> to vector<16x32xf32>
    %6 = arith.addf %3, %5 : vector<16x32xf32>
    %cst_7 = arith.constant 0.000000e+00 : f32
    %7 = vector.broadcast %cst_7 : f32 to vector<16x32xf32>
    %8 = arith.maximumf %6, %7 : vector<16x32xf32>
    %c0_8 = arith.constant 0 : index
    %c0_9 = arith.constant 0 : index
    %9 = vector.load %arg4[%c0_8, %c0_9] : memref<32x256xf32, #tpu.memory_space<vmem>>, vector<32x256xf32>
    %cst_10 = arith.constant dense<0.000000e+00> : vector<16x256xf32>
    %10 = tpu.matmul %8, %9, %cst_10 {dimension_numbers = #tpu.dot_dimension_numbers<[1], [0], [0], [1], [0, 0, 1, 1], [], []>} : vector<16x32xf32>, vector<32x256xf32>, vector<16x256xf32> -> vector<16x256xf32>
    %c0_11 = arith.constant 0 : index
    %c0_12 = arith.constant 0 : index
    %11 = vector.load %arg5[%c0_11, %c0_12] : memref<1x256xf32, #tpu.memory_space<vmem>>, vector<1x256xf32>
    %12 = vector.broadcast %11 : vector<1x256xf32> to vector<16x256xf32>
    %13 = arith.addf %10, %12 : vector<16x256xf32>
    %14 = vector.shape_cast %13 : vector<16x256xf32> to vector<8x2x256xf32>
    %c0_13 = arith.constant 0 : index
    %c0_14 = arith.constant 0 : index
    %c0_15 = arith.constant 0 : index
    %15 = vector.load %arg12[%c0_13, %c0_14, %c0_15] : memref<8x2x256xf32, #tpu.memory_space<vmem>>, vector<8x2x256xf32>
    tpu.vector_store %arg12[%c0_13, %c0_14, %c0_15], %14 {strides = array<i32>} : memref<8x2x256xf32, #tpu.memory_space<vmem>>, vector<8x2x256xf32>,
    %c0_16 = arith.constant 0 : index
    %c0_17 = arith.constant 0 : index
    %16 = vector.load %arg8[%c0_16, %c0_17] : memref<1x256xf32, #tpu.memory_space<vmem>>, vector<1x256xf32>
    %17 = vector.shape_cast %16 : vector<1x256xf32> to vector<1x256xf32>
    %18 = vector.broadcast %17 : vector<1x256xf32> to vector<2x256xf32>
    %19 = tpu.iota {dimensions = array<i32: 1>} : vector<2x256xi32>
    %c192_i32 = arith.constant 192 : i32
    %20 = vector.broadcast %c192_i32 : i32 to vector<2x256xi32>
    %21 = arith.cmpi sge, %19, %20 : vector<2x256xi32>
    %cst_18 = arith.constant 1.000000e+00 : f32
    %cst_19 = arith.constant 5.000000e-01 : f32
    %22 = vector.broadcast %cst_18 : f32 to vector<2x256xf32>
    %23 = vector.broadcast %cst_19 : f32 to vector<2x256xf32>
    %24 = arith.select %21, %22, %23 : vector<2x256xi1>, vector<2x256xf32>
    %cst_20 = arith.constant 0.000000e+00 : f32
    %cst_21 = arith.constant 5.000000e-01 : f32
    %25 = vector.broadcast %cst_20 : f32 to vector<2x256xf32>
    %26 = vector.broadcast %cst_21 : f32 to vector<2x256xf32>
    %27 = arith.select %21, %25, %26 : vector<2x256xi1>, vector<2x256xf32>
    %cst_22 = arith.constant 0.000000e+00 : f32
    %28 = vector.broadcast %cst_22 : f32 to vector<2x64xf32>
    %cst_23 = arith.constant 0.000000e+00 : f32
    %29 = vector.broadcast %cst_23 : f32 to vector<2x256xf32>
    %c0_24 = arith.constant 0 : index
    %c0_25 = arith.constant 0 : index
    %c0_26 = arith.constant 0 : index
    %30 = vector.load %arg12[%c0_24, %c0_25, %c0_26] : memref<8x2x256xf32, #tpu.memory_space<vmem>>, vector<1x2x256xf32>
    %31 = vector.shape_cast %30 : vector<1x2x256xf32> to vector<2x256xf32>
    %32 = arith.addf %31, %29 : vector<2x256xf32>
    %33 = arith.mulf %32, %24 : vector<2x256xf32>
    %34 = math.tanh %33 : vector<2x256xf32>
    %35 = arith.mulf %24, %34 : vector<2x256xf32>
    %36 = arith.addf %27, %35 : vector<2x256xf32>
    %37 = vector.extract_strided_slice %36 {offsets = [0, 0], sizes = [2, 64], strides = [1, 1]} : vector<2x256xf32> to vector<2x64xf32>
    %38 = vector.extract_strided_slice %36 {offsets = [0, 64], sizes = [2, 64], strides = [1, 1]} : vector<2x256xf32> to vector<2x64xf32>
    %39 = vector.extract_strided_slice %36 {offsets = [0, 128], sizes = [2, 64], strides = [1, 1]} : vector<2x256xf32> to vector<2x64xf32>
    %40 = vector.extract_strided_slice %36 {offsets = [0, 192], sizes = [2, 64], strides = [1, 1]} : vector<2x256xf32> to vector<2x64xf32>
    %41 = arith.mulf %37, %28 : vector<2x64xf32>
    %42 = arith.mulf %38, %40 : vector<2x64xf32>
    %43 = arith.addf %41, %42 : vector<2x64xf32>
    %44 = math.tanh %43 : vector<2x64xf32>
    %45 = arith.mulf %39, %44 : vector<2x64xf32>
    %c0_27 = arith.constant 0 : index
    %c0_28 = arith.constant 0 : index
    %46 = vector.load %arg6[%c0_27, %c0_28] : memref<64x512xf32, #tpu.memory_space<vmem>>, vector<64x512xf32>
    %cst_29 = arith.constant dense<0.000000e+00> : vector<2x512xf32>
    %47 = tpu.matmul %45, %46, %cst_29 {dimension_numbers = #tpu.dot_dimension_numbers<[1], [0], [0], [1], [0, 0, 1, 1], [], []>} : vector<2x64xf32>, vector<64x512xf32>, vector<2x512xf32> -> vector<2x512xf32>
    %48 = vector.extract_strided_slice %47 {offsets = [0, 256], sizes = [2, 256], strides = [1, 1]} : vector<2x512xf32> to vector<2x256xf32>
    %49 = arith.addf %48, %29 : vector<2x256xf32>
    %50 = arith.addf %49, %18 : vector<2x256xf32>
    %51 = arith.mulf %50, %24 : vector<2x256xf32>
    %52 = math.tanh %51 : vector<2x256xf32>
    %53 = arith.mulf %24, %52 : vector<2x256xf32>
    %54 = arith.addf %27, %53 : vector<2x256xf32>
    %55 = vector.extract_strided_slice %54 {offsets = [0, 0], sizes = [2, 64], strides = [1, 1]} : vector<2x256xf32> to vector<2x64xf32>
    %56 = vector.extract_strided_slice %54 {offsets = [0, 64], sizes = [2, 64], strides = [1, 1]} : vector<2x256xf32> to vector<2x64xf32>
    %57 = vector.extract_strided_slice %54 {offsets = [0, 128], sizes = [2, 64], strides = [1, 1]} : vector<2x256xf32> to vector<2x64xf32>
    %58 = vector.extract_strided_slice %54 {offsets = [0, 192], sizes = [2, 64], strides = [1, 1]} : vector<2x256xf32> to vector<2x64xf32>
    %59 = arith.mulf %55, %28 : vector<2x64xf32>
    %60 = arith.mulf %56, %58 : vector<2x64xf32>
    %61 = arith.addf %59, %60 : vector<2x64xf32>
    %62 = math.tanh %61 : vector<2x64xf32>
    %63 = arith.mulf %57, %62 : vector<2x64xf32>
    %64 = vector.extract_strided_slice %47 {offsets = [0, 0], sizes = [2, 256], strides = [1, 1]} : vector<2x512xf32> to vector<2x256xf32>
    %c0_30 = arith.constant 0 : index
    %c0_31 = arith.constant 0 : index
    %65 = vector.load %arg7[%c0_30, %c0_31] : memref<64x256xf32, #tpu.memory_space<vmem>>, vector<64x256xf32>
    %cst_32 = arith.constant dense<0.000000e+00> : vector<2x256xf32>
    %66 = tpu.matmul %63, %65, %cst_32 {dimension_numbers = #tpu.dot_dimension_numbers<[1], [0], [0], [1], [0, 0, 1, 1], [], []>} : vector<2x64xf32>, vector<64x256xf32>, vector<2x256xf32> -> vector<2x256xf32>
    %c1 = arith.constant 1 : index
    %c0_33 = arith.constant 0 : index
    %c0_34 = arith.constant 0 : index
    %67 = vector.load %arg12[%c1, %c0_33, %c0_34] : memref<8x2x256xf32, #tpu.memory_space<vmem>>, vector<1x2x256xf32>
    %68 = vector.shape_cast %67 : vector<1x2x256xf32> to vector<2x256xf32>
    %69 = arith.addf %68, %64 : vector<2x256xf32>
    %70 = arith.mulf %69, %24 : vector<2x256xf32>
    %71 = math.tanh %70 : vector<2x256xf32>
    %72 = arith.mulf %24, %71 : vector<2x256xf32>
    %73 = arith.addf %27, %72 : vector<2x256xf32>
    %74 = vector.extract_strided_slice %73 {offsets = [0, 0], sizes = [2, 64], strides = [1, 1]} : vector<2x256xf32> to vector<2x64xf32>
    %75 = vector.extract_strided_slice %73 {offsets = [0, 64], sizes = [2, 64], strides = [1, 1]} : vector<2x256xf32> to vector<2x64xf32>
    %76 = vector.extract_strided_slice %73 {offsets = [0, 128], sizes = [2, 64], strides = [1, 1]} : vector<2x256xf32> to vector<2x64xf32>
    %77 = vector.extract_strided_slice %73 {offsets = [0, 192], sizes = [2, 64], strides = [1, 1]} : vector<2x256xf32> to vector<2x64xf32>
    %78 = arith.mulf %74, %43 : vector<2x64xf32>
    %79 = arith.mulf %75, %77 : vector<2x64xf32>
    %80 = arith.addf %78, %79 : vector<2x64xf32>
    %81 = math.tanh %80 : vector<2x64xf32>
    %82 = arith.mulf %76, %81 : vector<2x64xf32>
    %c0_35 = arith.constant 0 : index
    %c0_36 = arith.constant 0 : index
    %83 = vector.load %arg6[%c0_35, %c0_36] : memref<64x512xf32, #tpu.memory_space<vmem>>, vector<64x512xf32>
    %cst_37 = arith.constant dense<0.000000e+00> : vector<2x512xf32>
    %84 = tpu.matmul %82, %83, %cst_37 {dimension_numbers = #tpu.dot_dimension_numbers<[1], [0], [0], [1], [0, 0, 1, 1], [], []>} : vector<2x64xf32>, vector<64x512xf32>, vector<2x512xf32> -> vector<2x512xf32>
    %85 = vector.extract_strided_slice %84 {offsets = [0, 256], sizes = [2, 256], strides = [1, 1]} : vector<2x512xf32> to vector<2x256xf32>
    %86 = arith.addf %85, %66 : vector<2x256xf32>
    %87 = arith.addf %86, %18 : vector<2x256xf32>
    %88 = arith.mulf %87, %24 : vector<2x256xf32>
    %89 = math.tanh %88 : vector<2x256xf32>
    %90 = arith.mulf %24, %89 : vector<2x256xf32>
    %91 = arith.addf %27, %90 : vector<2x256xf32>
    %92 = vector.extract_strided_slice %91 {offsets = [0, 0], sizes = [2, 64], strides = [1, 1]} : vector<2x256xf32> to vector<2x64xf32>
    %93 = vector.extract_strided_slice %91 {offsets = [0, 64], sizes = [2, 64], strides = [1, 1]} : vector<2x256xf32> to vector<2x64xf32>
    %94 = vector.extract_strided_slice %91 {offsets = [0, 128], sizes = [2, 64], strides = [1, 1]} : vector<2x256xf32> to vector<2x64xf32>
    %95 = vector.extract_strided_slice %91 {offsets = [0, 192], sizes = [2, 64], strides = [1, 1]} : vector<2x256xf32> to vector<2x64xf32>
    %96 = arith.mulf %92, %61 : vector<2x64xf32>
    %97 = arith.mulf %93, %95 : vector<2x64xf32>
    %98 = arith.addf %96, %97 : vector<2x64xf32>
    %99 = math.tanh %98 : vector<2x64xf32>
    %100 = arith.mulf %94, %99 : vector<2x64xf32>
    %101 = vector.extract_strided_slice %84 {offsets = [0, 0], sizes = [2, 256], strides = [1, 1]} : vector<2x512xf32> to vector<2x256xf32>
    %c0_38 = arith.constant 0 : index
    %c0_39 = arith.constant 0 : index
    %102 = vector.load %arg7[%c0_38, %c0_39] : memref<64x256xf32, #tpu.memory_space<vmem>>, vector<64x256xf32>
    %cst_40 = arith.constant dense<0.000000e+00> : vector<2x256xf32>
    %103 = tpu.matmul %100, %102, %cst_40 {dimension_numbers = #tpu.dot_dimension_numbers<[1], [0], [0], [1], [0, 0, 1, 1], [], []>} : vector<2x64xf32>, vector<64x256xf32>, vector<2x256xf32> -> vector<2x256xf32>
    %c2 = arith.constant 2 : index
    %c0_41 = arith.constant 0 : index
    %c0_42 = arith.constant 0 : index
    %104 = vector.load %arg12[%c2, %c0_41, %c0_42] : memref<8x2x256xf32, #tpu.memory_space<vmem>>, vector<1x2x256xf32>
    %105 = vector.shape_cast %104 : vector<1x2x256xf32> to vector<2x256xf32>
    %106 = arith.addf %105, %101 : vector<2x256xf32>
    %107 = arith.mulf %106, %24 : vector<2x256xf32>
    %108 = math.tanh %107 : vector<2x256xf32>
    %109 = arith.mulf %24, %108 : vector<2x256xf32>
    %110 = arith.addf %27, %109 : vector<2x256xf32>
    %111 = vector.extract_strided_slice %110 {offsets = [0, 0], sizes = [2, 64], strides = [1, 1]} : vector<2x256xf32> to vector<2x64xf32>
    %112 = vector.extract_strided_slice %110 {offsets = [0, 64], sizes = [2, 64], strides = [1, 1]} : vector<2x256xf32> to vector<2x64xf32>
    %113 = vector.extract_strided_slice %110 {offsets = [0, 128], sizes = [2, 64], strides = [1, 1]} : vector<2x256xf32> to vector<2x64xf32>
    %114 = vector.extract_strided_slice %110 {offsets = [0, 192], sizes = [2, 64], strides = [1, 1]} : vector<2x256xf32> to vector<2x64xf32>
    %115 = arith.mulf %111, %80 : vector<2x64xf32>
    %116 = arith.mulf %112, %114 : vector<2x64xf32>
    %117 = arith.addf %115, %116 : vector<2x64xf32>
    %118 = math.tanh %117 : vector<2x64xf32>
    %119 = arith.mulf %113, %118 : vector<2x64xf32>
    %c0_43 = arith.constant 0 : index
    %c0_44 = arith.constant 0 : index
    %120 = vector.load %arg6[%c0_43, %c0_44] : memref<64x512xf32, #tpu.memory_space<vmem>>, vector<64x512xf32>
    %cst_45 = arith.constant dense<0.000000e+00> : vector<2x512xf32>
    %121 = tpu.matmul %119, %120, %cst_45 {dimension_numbers = #tpu.dot_dimension_numbers<[1], [0], [0], [1], [0, 0, 1, 1], [], []>} : vector<2x64xf32>, vector<64x512xf32>, vector<2x512xf32> -> vector<2x512xf32>
    %122 = vector.extract_strided_slice %121 {offsets = [0, 256], sizes = [2, 256], strides = [1, 1]} : vector<2x512xf32> to vector<2x256xf32>
    %123 = arith.addf %122, %103 : vector<2x256xf32>
    %124 = arith.addf %123, %18 : vector<2x256xf32>
    %125 = arith.mulf %124, %24 : vector<2x256xf32>
    %126 = math.tanh %125 : vector<2x256xf32>
    %127 = arith.mulf %24, %126 : vector<2x256xf32>
    %128 = arith.addf %27, %127 : vector<2x256xf32>
    %129 = vector.extract_strided_slice %128 {offsets = [0, 0], sizes = [2, 64], strides = [1, 1]} : vector<2x256xf32> to vector<2x64xf32>
    %130 = vector.extract_strided_slice %128 {offsets = [0, 64], sizes = [2, 64], strides = [1, 1]} : vector<2x256xf32> to vector<2x64xf32>
    %131 = vector.extract_strided_slice %128 {offsets = [0, 128], sizes = [2, 64], strides = [1, 1]} : vector<2x256xf32> to vector<2x64xf32>
    %132 = vector.extract_strided_slice %128 {offsets = [0, 192], sizes = [2, 64], strides = [1, 1]} : vector<2x256xf32> to vector<2x64xf32>
    %133 = arith.mulf %129, %98 : vector<2x64xf32>
    %134 = arith.mulf %130, %132 : vector<2x64xf32>
    %135 = arith.addf %133, %134 : vector<2x64xf32>
    %136 = math.tanh %135 : vector<2x64xf32>
    %137 = arith.mulf %131, %136 : vector<2x64xf32>
    %138 = vector.extract_strided_slice %121 {offsets = [0, 0], sizes = [2, 256], strides = [1, 1]} : vector<2x512xf32> to vector<2x256xf32>
    %c0_46 = arith.constant 0 : index
    %c0_47 = arith.constant 0 : index
    %139 = vector.load %arg7[%c0_46, %c0_47] : memref<64x256xf32, #tpu.memory_space<vmem>>, vector<64x256xf32>
    %cst_48 = arith.constant dense<0.000000e+00> : vector<2x256xf32>
    %140 = tpu.matmul %137, %139, %cst_48 {dimension_numbers = #tpu.dot_dimension_numbers<[1], [0], [0], [1], [0, 0, 1, 1], [], []>} : vector<2x64xf32>, vector<64x256xf32>, vector<2x256xf32> -> vector<2x256xf32>
    %c3 = arith.constant 3 : index
    %c0_49 = arith.constant 0 : index
    %c0_50 = arith.constant 0 : index
    %141 = vector.load %arg12[%c3, %c0_49, %c0_50] : memref<8x2x256xf32, #tpu.memory_space<vmem>>, vector<1x2x256xf32>
    %142 = vector.shape_cast %141 : vector<1x2x256xf32> to vector<2x256xf32>
    %143 = arith.addf %142, %138 : vector<2x256xf32>
    %144 = arith.mulf %143, %24 : vector<2x256xf32>
    %145 = math.tanh %144 : vector<2x256xf32>
    %146 = arith.mulf %24, %145 : vector<2x256xf32>
    %147 = arith.addf %27, %146 : vector<2x256xf32>
    %148 = vector.extract_strided_slice %147 {offsets = [0, 0], sizes = [2, 64], strides = [1, 1]} : vector<2x256xf32> to vector<2x64xf32>
    %149 = vector.extract_strided_slice %147 {offsets = [0, 64], sizes = [2, 64], strides = [1, 1]} : vector<2x256xf32> to vector<2x64xf32>
    %150 = vector.extract_strided_slice %147 {offsets = [0, 128], sizes = [2, 64], strides = [1, 1]} : vector<2x256xf32> to vector<2x64xf32>
    %151 = vector.extract_strided_slice %147 {offsets = [0, 192], sizes = [2, 64], strides = [1, 1]} : vector<2x256xf32> to vector<2x64xf32>
    %152 = arith.mulf %148, %117 : vector<2x64xf32>
    %153 = arith.mulf %149, %151 : vector<2x64xf32>
    %154 = arith.addf %152, %153 : vector<2x64xf32>
    %155 = math.tanh %154 : vector<2x64xf32>
    %156 = arith.mulf %150, %155 : vector<2x64xf32>
    %c0_51 = arith.constant 0 : index
    %c0_52 = arith.constant 0 : index
    %157 = vector.load %arg6[%c0_51, %c0_52] : memref<64x512xf32, #tpu.memory_space<vmem>>, vector<64x512xf32>
    %cst_53 = arith.constant dense<0.000000e+00> : vector<2x512xf32>
    %158 = tpu.matmul %156, %157, %cst_53 {dimension_numbers = #tpu.dot_dimension_numbers<[1], [0], [0], [1], [0, 0, 1, 1], [], []>} : vector<2x64xf32>, vector<64x512xf32>, vector<2x512xf32> -> vector<2x512xf32>
    %159 = vector.extract_strided_slice %158 {offsets = [0, 256], sizes = [2, 256], strides = [1, 1]} : vector<2x512xf32> to vector<2x256xf32>
    %160 = arith.addf %159, %140 : vector<2x256xf32>
    %161 = arith.addf %160, %18 : vector<2x256xf32>
    %162 = arith.mulf %161, %24 : vector<2x256xf32>
    %163 = math.tanh %162 : vector<2x256xf32>
    %164 = arith.mulf %24, %163 : vector<2x256xf32>
    %165 = arith.addf %27, %164 : vector<2x256xf32>
    %166 = vector.extract_strided_slice %165 {offsets = [0, 0], sizes = [2, 64], strides = [1, 1]} : vector<2x256xf32> to vector<2x64xf32>
    %167 = vector.extract_strided_slice %165 {offsets = [0, 64], sizes = [2, 64], strides = [1, 1]} : vector<2x256xf32> to vector<2x64xf32>
    %168 = vector.extract_strided_slice %165 {offsets = [0, 128], sizes = [2, 64], strides = [1, 1]} : vector<2x256xf32> to vector<2x64xf32>
    %169 = vector.extract_strided_slice %165 {offsets = [0, 192], sizes = [2, 64], strides = [1, 1]} : vector<2x256xf32> to vector<2x64xf32>
    %170 = arith.mulf %166, %135 : vector<2x64xf32>
    %171 = arith.mulf %167, %169 : vector<2x64xf32>
    %172 = arith.addf %170, %171 : vector<2x64xf32>
    %173 = math.tanh %172 : vector<2x64xf32>
    %174 = arith.mulf %168, %173 : vector<2x64xf32>
    %175 = vector.extract_strided_slice %158 {offsets = [0, 0], sizes = [2, 256], strides = [1, 1]} : vector<2x512xf32> to vector<2x256xf32>
    %c0_54 = arith.constant 0 : index
    %c0_55 = arith.constant 0 : index
    %176 = vector.load %arg7[%c0_54, %c0_55] : memref<64x256xf32, #tpu.memory_space<vmem>>, vector<64x256xf32>
    %cst_56 = arith.constant dense<0.000000e+00> : vector<2x256xf32>
    %177 = tpu.matmul %174, %176, %cst_56 {dimension_numbers = #tpu.dot_dimension_numbers<[1], [0], [0], [1], [0, 0, 1, 1], [], []>} : vector<2x64xf32>, vector<64x256xf32>, vector<2x256xf32> -> vector<2x256xf32>
    %c4 = arith.constant 4 : index
    %c0_57 = arith.constant 0 : index
    %c0_58 = arith.constant 0 : index
    %178 = vector.load %arg12[%c4, %c0_57, %c0_58] : memref<8x2x256xf32, #tpu.memory_space<vmem>>, vector<1x2x256xf32>
    %179 = vector.shape_cast %178 : vector<1x2x256xf32> to vector<2x256xf32>
    %180 = arith.addf %179, %175 : vector<2x256xf32>
    %181 = arith.mulf %180, %24 : vector<2x256xf32>
    %182 = math.tanh %181 : vector<2x256xf32>
    %183 = arith.mulf %24, %182 : vector<2x256xf32>
    %184 = arith.addf %27, %183 : vector<2x256xf32>
    %185 = vector.extract_strided_slice %184 {offsets = [0, 0], sizes = [2, 64], strides = [1, 1]} : vector<2x256xf32> to vector<2x64xf32>
    %186 = vector.extract_strided_slice %184 {offsets = [0, 64], sizes = [2, 64], strides = [1, 1]} : vector<2x256xf32> to vector<2x64xf32>
    %187 = vector.extract_strided_slice %184 {offsets = [0, 128], sizes = [2, 64], strides = [1, 1]} : vector<2x256xf32> to vector<2x64xf32>
    %188 = vector.extract_strided_slice %184 {offsets = [0, 192], sizes = [2, 64], strides = [1, 1]} : vector<2x256xf32> to vector<2x64xf32>
    %189 = arith.mulf %185, %154 : vector<2x64xf32>
    %190 = arith.mulf %186, %188 : vector<2x64xf32>
    %191 = arith.addf %189, %190 : vector<2x64xf32>
    %192 = math.tanh %191 : vector<2x64xf32>
    %193 = arith.mulf %187, %192 : vector<2x64xf32>
    %c0_59 = arith.constant 0 : index
    %c0_60 = arith.constant 0 : index
    %194 = vector.load %arg6[%c0_59, %c0_60] : memref<64x512xf32, #tpu.memory_space<vmem>>, vector<64x512xf32>
    %cst_61 = arith.constant dense<0.000000e+00> : vector<2x512xf32>
    %195 = tpu.matmul %193, %194, %cst_61 {dimension_numbers = #tpu.dot_dimension_numbers<[1], [0], [0], [1], [0, 0, 1, 1], [], []>} : vector<2x64xf32>, vector<64x512xf32>, vector<2x512xf32> -> vector<2x512xf32>
    %196 = vector.extract_strided_slice %195 {offsets = [0, 256], sizes = [2, 256], strides = [1, 1]} : vector<2x512xf32> to vector<2x256xf32>
    %197 = arith.addf %196, %177 : vector<2x256xf32>
    %198 = arith.addf %197, %18 : vector<2x256xf32>
    %199 = arith.mulf %198, %24 : vector<2x256xf32>
    %200 = math.tanh %199 : vector<2x256xf32>
    %201 = arith.mulf %24, %200 : vector<2x256xf32>
    %202 = arith.addf %27, %201 : vector<2x256xf32>
    %203 = vector.extract_strided_slice %202 {offsets = [0, 0], sizes = [2, 64], strides = [1, 1]} : vector<2x256xf32> to vector<2x64xf32>
    %204 = vector.extract_strided_slice %202 {offsets = [0, 64], sizes = [2, 64], strides = [1, 1]} : vector<2x256xf32> to vector<2x64xf32>
    %205 = vector.extract_strided_slice %202 {offsets = [0, 128], sizes = [2, 64], strides = [1, 1]} : vector<2x256xf32> to vector<2x64xf32>
    %206 = vector.extract_strided_slice %202 {offsets = [0, 192], sizes = [2, 64], strides = [1, 1]} : vector<2x256xf32> to vector<2x64xf32>
    %207 = arith.mulf %203, %172 : vector<2x64xf32>
    %208 = arith.mulf %204, %206 : vector<2x64xf32>
    %209 = arith.addf %207, %208 : vector<2x64xf32>
    %210 = math.tanh %209 : vector<2x64xf32>
    %211 = arith.mulf %205, %210 : vector<2x64xf32>
    %212 = vector.extract_strided_slice %195 {offsets = [0, 0], sizes = [2, 256], strides = [1, 1]} : vector<2x512xf32> to vector<2x256xf32>
    %c0_62 = arith.constant 0 : index
    %c0_63 = arith.constant 0 : index
    %213 = vector.load %arg7[%c0_62, %c0_63] : memref<64x256xf32, #tpu.memory_space<vmem>>, vector<64x256xf32>
    %cst_64 = arith.constant dense<0.000000e+00> : vector<2x256xf32>
    %214 = tpu.matmul %211, %213, %cst_64 {dimension_numbers = #tpu.dot_dimension_numbers<[1], [0], [0], [1], [0, 0, 1, 1], [], []>} : vector<2x64xf32>, vector<64x256xf32>, vector<2x256xf32> -> vector<2x256xf32>
    %c5 = arith.constant 5 : index
    %c0_65 = arith.constant 0 : index
    %c0_66 = arith.constant 0 : index
    %215 = vector.load %arg12[%c5, %c0_65, %c0_66] : memref<8x2x256xf32, #tpu.memory_space<vmem>>, vector<1x2x256xf32>
    %216 = vector.shape_cast %215 : vector<1x2x256xf32> to vector<2x256xf32>
    %217 = arith.addf %216, %212 : vector<2x256xf32>
    %218 = arith.mulf %217, %24 : vector<2x256xf32>
    %219 = math.tanh %218 : vector<2x256xf32>
    %220 = arith.mulf %24, %219 : vector<2x256xf32>
    %221 = arith.addf %27, %220 : vector<2x256xf32>
    %222 = vector.extract_strided_slice %221 {offsets = [0, 0], sizes = [2, 64], strides = [1, 1]} : vector<2x256xf32> to vector<2x64xf32>
    %223 = vector.extract_strided_slice %221 {offsets = [0, 64], sizes = [2, 64], strides = [1, 1]} : vector<2x256xf32> to vector<2x64xf32>
    %224 = vector.extract_strided_slice %221 {offsets = [0, 128], sizes = [2, 64], strides = [1, 1]} : vector<2x256xf32> to vector<2x64xf32>
    %225 = vector.extract_strided_slice %221 {offsets = [0, 192], sizes = [2, 64], strides = [1, 1]} : vector<2x256xf32> to vector<2x64xf32>
    %226 = arith.mulf %222, %191 : vector<2x64xf32>
    %227 = arith.mulf %223, %225 : vector<2x64xf32>
    %228 = arith.addf %226, %227 : vector<2x64xf32>
    %229 = math.tanh %228 : vector<2x64xf32>
    %230 = arith.mulf %224, %229 : vector<2x64xf32>
    %c0_67 = arith.constant 0 : index
    %c0_68 = arith.constant 0 : index
    %231 = vector.load %arg6[%c0_67, %c0_68] : memref<64x512xf32, #tpu.memory_space<vmem>>, vector<64x512xf32>
    %cst_69 = arith.constant dense<0.000000e+00> : vector<2x512xf32>
    %232 = tpu.matmul %230, %231, %cst_69 {dimension_numbers = #tpu.dot_dimension_numbers<[1], [0], [0], [1], [0, 0, 1, 1], [], []>} : vector<2x64xf32>, vector<64x512xf32>, vector<2x512xf32> -> vector<2x512xf32>
    %233 = vector.extract_strided_slice %232 {offsets = [0, 256], sizes = [2, 256], strides = [1, 1]} : vector<2x512xf32> to vector<2x256xf32>
    %234 = arith.addf %233, %214 : vector<2x256xf32>
    %235 = arith.addf %234, %18 : vector<2x256xf32>
    %236 = arith.mulf %235, %24 : vector<2x256xf32>
    %237 = math.tanh %236 : vector<2x256xf32>
    %238 = arith.mulf %24, %237 : vector<2x256xf32>
    %239 = arith.addf %27, %238 : vector<2x256xf32>
    %240 = vector.extract_strided_slice %239 {offsets = [0, 0], sizes = [2, 64], strides = [1, 1]} : vector<2x256xf32> to vector<2x64xf32>
    %241 = vector.extract_strided_slice %239 {offsets = [0, 64], sizes = [2, 64], strides = [1, 1]} : vector<2x256xf32> to vector<2x64xf32>
    %242 = vector.extract_strided_slice %239 {offsets = [0, 128], sizes = [2, 64], strides = [1, 1]} : vector<2x256xf32> to vector<2x64xf32>
    %243 = vector.extract_strided_slice %239 {offsets = [0, 192], sizes = [2, 64], strides = [1, 1]} : vector<2x256xf32> to vector<2x64xf32>
    %244 = arith.mulf %240, %209 : vector<2x64xf32>
    %245 = arith.mulf %241, %243 : vector<2x64xf32>
    %246 = arith.addf %244, %245 : vector<2x64xf32>
    %247 = math.tanh %246 : vector<2x64xf32>
    %248 = arith.mulf %242, %247 : vector<2x64xf32>
    %249 = vector.extract_strided_slice %232 {offsets = [0, 0], sizes = [2, 256], strides = [1, 1]} : vector<2x512xf32> to vector<2x256xf32>
    %c0_70 = arith.constant 0 : index
    %c0_71 = arith.constant 0 : index
    %250 = vector.load %arg7[%c0_70, %c0_71] : memref<64x256xf32, #tpu.memory_space<vmem>>, vector<64x256xf32>
    %cst_72 = arith.constant dense<0.000000e+00> : vector<2x256xf32>
    %251 = tpu.matmul %248, %250, %cst_72 {dimension_numbers = #tpu.dot_dimension_numbers<[1], [0], [0], [1], [0, 0, 1, 1], [], []>} : vector<2x64xf32>, vector<64x256xf32>, vector<2x256xf32> -> vector<2x256xf32>
    %c6 = arith.constant 6 : index
    %c0_73 = arith.constant 0 : index
    %c0_74 = arith.constant 0 : index
    %252 = vector.load %arg12[%c6, %c0_73, %c0_74] : memref<8x2x256xf32, #tpu.memory_space<vmem>>, vector<1x2x256xf32>
    %253 = vector.shape_cast %252 : vector<1x2x256xf32> to vector<2x256xf32>
    %254 = arith.addf %253, %249 : vector<2x256xf32>
    %255 = arith.mulf %254, %24 : vector<2x256xf32>
    %256 = math.tanh %255 : vector<2x256xf32>
    %257 = arith.mulf %24, %256 : vector<2x256xf32>
    %258 = arith.addf %27, %257 : vector<2x256xf32>
    %259 = vector.extract_strided_slice %258 {offsets = [0, 0], sizes = [2, 64], strides = [1, 1]} : vector<2x256xf32> to vector<2x64xf32>
    %260 = vector.extract_strided_slice %258 {offsets = [0, 64], sizes = [2, 64], strides = [1, 1]} : vector<2x256xf32> to vector<2x64xf32>
    %261 = vector.extract_strided_slice %258 {offsets = [0, 128], sizes = [2, 64], strides = [1, 1]} : vector<2x256xf32> to vector<2x64xf32>
    %262 = vector.extract_strided_slice %258 {offsets = [0, 192], sizes = [2, 64], strides = [1, 1]} : vector<2x256xf32> to vector<2x64xf32>
    %263 = arith.mulf %259, %228 : vector<2x64xf32>
    %264 = arith.mulf %260, %262 : vector<2x64xf32>
    %265 = arith.addf %263, %264 : vector<2x64xf32>
    %266 = math.tanh %265 : vector<2x64xf32>
    %267 = arith.mulf %261, %266 : vector<2x64xf32>
    %c0_75 = arith.constant 0 : index
    %c0_76 = arith.constant 0 : index
    %268 = vector.load %arg6[%c0_75, %c0_76] : memref<64x512xf32, #tpu.memory_space<vmem>>, vector<64x512xf32>
    %cst_77 = arith.constant dense<0.000000e+00> : vector<2x512xf32>
    %269 = tpu.matmul %267, %268, %cst_77 {dimension_numbers = #tpu.dot_dimension_numbers<[1], [0], [0], [1], [0, 0, 1, 1], [], []>} : vector<2x64xf32>, vector<64x512xf32>, vector<2x512xf32> -> vector<2x512xf32>
    %270 = vector.extract_strided_slice %269 {offsets = [0, 256], sizes = [2, 256], strides = [1, 1]} : vector<2x512xf32> to vector<2x256xf32>
    %271 = arith.addf %270, %251 : vector<2x256xf32>
    %272 = arith.addf %271, %18 : vector<2x256xf32>
    %273 = arith.mulf %272, %24 : vector<2x256xf32>
    %274 = math.tanh %273 : vector<2x256xf32>
    %275 = arith.mulf %24, %274 : vector<2x256xf32>
    %276 = arith.addf %27, %275 : vector<2x256xf32>
    %277 = vector.extract_strided_slice %276 {offsets = [0, 0], sizes = [2, 64], strides = [1, 1]} : vector<2x256xf32> to vector<2x64xf32>
    %278 = vector.extract_strided_slice %276 {offsets = [0, 64], sizes = [2, 64], strides = [1, 1]} : vector<2x256xf32> to vector<2x64xf32>
    %279 = vector.extract_strided_slice %276 {offsets = [0, 128], sizes = [2, 64], strides = [1, 1]} : vector<2x256xf32> to vector<2x64xf32>
    %280 = vector.extract_strided_slice %276 {offsets = [0, 192], sizes = [2, 64], strides = [1, 1]} : vector<2x256xf32> to vector<2x64xf32>
    %281 = arith.mulf %277, %246 : vector<2x64xf32>
    %282 = arith.mulf %278, %280 : vector<2x64xf32>
    %283 = arith.addf %281, %282 : vector<2x64xf32>
    %284 = math.tanh %283 : vector<2x64xf32>
    %285 = arith.mulf %279, %284 : vector<2x64xf32>
    %286 = vector.extract_strided_slice %269 {offsets = [0, 0], sizes = [2, 256], strides = [1, 1]} : vector<2x512xf32> to vector<2x256xf32>
    %c0_78 = arith.constant 0 : index
    %c0_79 = arith.constant 0 : index
    %287 = vector.load %arg7[%c0_78, %c0_79] : memref<64x256xf32, #tpu.memory_space<vmem>>, vector<64x256xf32>
    %cst_80 = arith.constant dense<0.000000e+00> : vector<2x256xf32>
    %288 = tpu.matmul %285, %287, %cst_80 {dimension_numbers = #tpu.dot_dimension_numbers<[1], [0], [0], [1], [0, 0, 1, 1], [], []>} : vector<2x64xf32>, vector<64x256xf32>, vector<2x256xf32> -> vector<2x256xf32>
    %c7 = arith.constant 7 : index
    %c0_81 = arith.constant 0 : index
    %c0_82 = arith.constant 0 : index
    %289 = vector.load %arg12[%c7, %c0_81, %c0_82] : memref<8x2x256xf32, #tpu.memory_space<vmem>>, vector<1x2x256xf32>
    %290 = vector.shape_cast %289 : vector<1x2x256xf32> to vector<2x256xf32>
    %291 = arith.addf %290, %286 : vector<2x256xf32>
    %292 = arith.mulf %291, %24 : vector<2x256xf32>
    %293 = math.tanh %292 : vector<2x256xf32>
    %294 = arith.mulf %24, %293 : vector<2x256xf32>
    %295 = arith.addf %27, %294 : vector<2x256xf32>
    %296 = vector.extract_strided_slice %295 {offsets = [0, 0], sizes = [2, 64], strides = [1, 1]} : vector<2x256xf32> to vector<2x64xf32>
    %297 = vector.extract_strided_slice %295 {offsets = [0, 64], sizes = [2, 64], strides = [1, 1]} : vector<2x256xf32> to vector<2x64xf32>
    %298 = vector.extract_strided_slice %295 {offsets = [0, 128], sizes = [2, 64], strides = [1, 1]} : vector<2x256xf32> to vector<2x64xf32>
    %299 = vector.extract_strided_slice %295 {offsets = [0, 192], sizes = [2, 64], strides = [1, 1]} : vector<2x256xf32> to vector<2x64xf32>
    %300 = arith.mulf %296, %265 : vector<2x64xf32>
    %301 = arith.mulf %297, %299 : vector<2x64xf32>
    %302 = arith.addf %300, %301 : vector<2x64xf32>
    %303 = math.tanh %302 : vector<2x64xf32>
    %304 = arith.mulf %298, %303 : vector<2x64xf32>
    %c0_83 = arith.constant 0 : index
    %c0_84 = arith.constant 0 : index
    %305 = vector.load %arg6[%c0_83, %c0_84] : memref<64x512xf32, #tpu.memory_space<vmem>>, vector<64x512xf32>
    %cst_85 = arith.constant dense<0.000000e+00> : vector<2x512xf32>
    %306 = tpu.matmul %304, %305, %cst_85 {dimension_numbers = #tpu.dot_dimension_numbers<[1], [0], [0], [1], [0, 0, 1, 1], [], []>} : vector<2x64xf32>, vector<64x512xf32>, vector<2x512xf32> -> vector<2x512xf32>
    %307 = vector.extract_strided_slice %306 {offsets = [0, 256], sizes = [2, 256], strides = [1, 1]} : vector<2x512xf32> to vector<2x256xf32>
    %308 = arith.addf %307, %288 : vector<2x256xf32>
    %309 = arith.addf %308, %18 : vector<2x256xf32>
    %310 = arith.mulf %309, %24 : vector<2x256xf32>
    %311 = math.tanh %310 : vector<2x256xf32>
    %312 = arith.mulf %24, %311 : vector<2x256xf32>
    %313 = arith.addf %27, %312 : vector<2x256xf32>
    %314 = vector.extract_strided_slice %313 {offsets = [0, 0], sizes = [2, 64], strides = [1, 1]} : vector<2x256xf32> to vector<2x64xf32>
    %315 = vector.extract_strided_slice %313 {offsets = [0, 64], sizes = [2, 64], strides = [1, 1]} : vector<2x256xf32> to vector<2x64xf32>
    %316 = vector.extract_strided_slice %313 {offsets = [0, 128], sizes = [2, 64], strides = [1, 1]} : vector<2x256xf32> to vector<2x64xf32>
    %317 = vector.extract_strided_slice %313 {offsets = [0, 192], sizes = [2, 64], strides = [1, 1]} : vector<2x256xf32> to vector<2x64xf32>
    %318 = arith.mulf %314, %283 : vector<2x64xf32>
    %319 = arith.mulf %315, %317 : vector<2x64xf32>
    %320 = arith.addf %318, %319 : vector<2x64xf32>
    %321 = math.tanh %320 : vector<2x64xf32>
    %322 = arith.mulf %316, %321 : vector<2x64xf32>
    %c0_86 = arith.constant 0 : index
    %c0_87 = arith.constant 0 : index
    %323 = vector.load %arg9[%c0_86, %c0_87] : memref<1x64xf32, #tpu.memory_space<vmem>>, vector<1x64xf32>
    %324 = vector.broadcast %323 : vector<1x64xf32> to vector<2x64xf32>
    %325 = arith.mulf %322, %324 : vector<2x64xf32>
    %cst_88 = arith.constant dense<0.000000e+00> : vector<2xf32>
    %326 = vector.multi_reduction <add>, %325, %cst_88 [1] : vector<2x64xf32> to vector<2xf32>
    %327 = vector.shape_cast %326 : vector<2xf32> to vector<2x1xf32>
    %c0_89 = arith.constant 0 : index
    %c0_90 = arith.constant 0 : index
    %328 = vector.load %arg10[%c0_89, %c0_90] : memref<1x1xf32, #tpu.memory_space<vmem>>, vector<1x1xf32>
    %329 = vector.broadcast %328 : vector<1x1xf32> to vector<2x1xf32>
    %330 = arith.addf %327, %329 : vector<2x1xf32>
    %331 = vector.shape_cast %330 : vector<2x1xf32> to vector<1x2x1xf32>
    %c0_91 = arith.constant 0 : index
    %c0_92 = arith.constant 0 : index
    %c0_93 = arith.constant 0 : index
    %332 = vector.load %arg11[%c0_91, %c0_92, %c0_93] : memref<1x2x1xf32, #tpu.memory_space<vmem>>, vector<1x2x1xf32>
    tpu.vector_store %arg11[%c0_91, %c0_92, %c0_93], %331 {strides = array<i32>} : memref<1x2x1xf32, #tpu.memory_space<vmem>>, vector<1x2x1xf32>,
    return
  }
  func.func @transform_0(%arg0: i32) -> (i32, i32, i32, i32) {
    %c0_i32 = arith.constant 0 : i32
    %c0_i32_0 = arith.constant 0 : i32
    %c0_i32_1 = arith.constant 0 : i32
    %c0_i32_2 = arith.constant 0 : i32
    return %arg0, %c0_i32, %c0_i32_0, %c0_i32_1 : i32, i32, i32, i32
  }
  func.func @transform_1(%arg0: i32) -> (i32, i32) {
    %c0_i32 = arith.constant 0 : i32
    %c0_i32_0 = arith.constant 0 : i32
    %c0_i32_1 = arith.constant 0 : i32
    return %c0_i32, %c0_i32_0 : i32, i32
  }
  func.func @transform_2(%arg0: i32) -> (i32, i32) {
    %c0_i32 = arith.constant 0 : i32
    %c0_i32_0 = arith.constant 0 : i32
    %c0_i32_1 = arith.constant 0 : i32
    return %c0_i32, %c0_i32_0 : i32, i32
  }
  func.func @transform_3(%arg0: i32) -> (i32, i32) {
    %c0_i32 = arith.constant 0 : i32
    %c0_i32_0 = arith.constant 0 : i32
    %c0_i32_1 = arith.constant 0 : i32
    return %c0_i32, %c0_i32_0 : i32, i32
  }
  func.func @transform_4(%arg0: i32) -> (i32, i32) {
    %c0_i32 = arith.constant 0 : i32
    %c0_i32_0 = arith.constant 0 : i32
    %c0_i32_1 = arith.constant 0 : i32
    return %c0_i32, %c0_i32_0 : i32, i32
  }
  func.func @transform_5(%arg0: i32) -> (i32, i32) {
    %c0_i32 = arith.constant 0 : i32
    %c0_i32_0 = arith.constant 0 : i32
    %c0_i32_1 = arith.constant 0 : i32
    return %c0_i32, %c0_i32_0 : i32, i32
  }
  func.func @transform_6(%arg0: i32) -> (i32, i32) {
    %c0_i32 = arith.constant 0 : i32
    %c0_i32_0 = arith.constant 0 : i32
    %c0_i32_1 = arith.constant 0 : i32
    return %c0_i32, %c0_i32_0 : i32, i32
  }
  func.func @transform_7(%arg0: i32) -> (i32, i32) {
    %c0_i32 = arith.constant 0 : i32
    %c0_i32_0 = arith.constant 0 : i32
    %c0_i32_1 = arith.constant 0 : i32
    return %c0_i32, %c0_i32_0 : i32, i32
  }
  func.func @transform_8(%arg0: i32) -> (i32, i32) {
    %c0_i32 = arith.constant 0 : i32
    %c0_i32_0 = arith.constant 0 : i32
    %c0_i32_1 = arith.constant 0 : i32
    return %c0_i32, %c0_i32_0 : i32, i32
  }
  func.func @transform_9(%arg0: i32) -> (i32, i32) {
    %c0_i32 = arith.constant 0 : i32
    %c0_i32_0 = arith.constant 0 : i32
    %c0_i32_1 = arith.constant 0 : i32
    return %c0_i32, %c0_i32_0 : i32, i32
  }
  func.func @transform_10(%arg0: i32) -> (i32, i32, i32) {
    %c0_i32 = arith.constant 0 : i32
    %c0_i32_0 = arith.constant 0 : i32
    %c0_i32_1 = arith.constant 0 : i32
    return %arg0, %c0_i32, %c0_i32_0 : i32, i32, i32
  }
}

</mosaic_0001>

<llo_original>
// kernel: conv_lstm_forward.1
$region0: #{conv_lstm_forward.1}
  #allocation0 [shape = 'u32[]', space=smem, size = 0x4, offset = 0x4, fixed_abs, tag = 'smem constant byte address 0x4 - core index']
  #allocation1 [shape = 'u32[72,128]{1,0:T(1,128)}', space=vmem, size = 0x9000, scoped, tag = 'internal scratch']
  #allocation2 [shape = 'f32[8,2,256]{2,1,0:T(2,128)}', space=vmem, size = 0x4000, scoped, tag = 'scratch operand']
  #allocation3 [shape = 'f32[1,1]{1,0:T(1,128)S(1)}', space=vmem, size = 0x200, scoped, tag = 'scoped memory for conv_lstm_forward.1']
  %s0 = inlined_call_operand.vmem [shape: f32[1,8,2,63], index: 0, kind: input, shape index: {}]
  %s1 = inlined_call_operand.vmem [shape: f32[63,32], index: 1, kind: input, shape index: {}]
  %s2 = inlined_call_operand.vmem [shape: f32[1,32], index: 2, kind: input, shape index: {}]
  %s3 = inlined_call_operand.vmem [shape: f32[32,256], index: 3, kind: input, shape index: {}]
  %s4 = inlined_call_operand.vmem [shape: f32[1,256], index: 4, kind: input, shape index: {}]
  %s5 = inlined_call_operand.hbm [shape: f32[64,512], index: 5, kind: input, shape index: {}]
  %s6 = inlined_call_operand.vmem [shape: f32[64,256], index: 6, kind: input, shape index: {}]
  %s7 = inlined_call_operand.vmem [shape: f32[1,256], index: 7, kind: input, shape index: {}]
  %s8 = inlined_call_operand.vmem [shape: f32[1,64], index: 8, kind: input, shape index: {}]
  %s9 = inlined_call_operand.<no memory space> [shape: f32[1,1], index: 9, kind: input, shape index: {}]
  %s10 = inlined_call_operand.vmem [shape: f32[1,2,1], index: 10, kind: output, shape index: {}]
  %s11 = sld [smem:[#allocation0]]
  $region54: #{conv_lstm_forward.1} parent=0
    _
  %s13 = ssub.s32 1, %s11
  %s14 = scalar_select 0, %s13, %s11
  %v15 = vstv %s9
  %16 = vst [vmem:[#allocation3] sm:$0x1] %v15
  $region1: #{conv_lstm_forward.1} parent=0
    #allocation4 [shape = 'u8[131072]{0}', space=vmem, size = 0x20000, scoped, tag = 'input window, operand 5, single buffered']
    #allocation5 [shape = 's32[1]{0}', space=sflag, size = 0x4, scoped, tag = 'scoped memory for conv_lstm_forward.1']
    %17 = vsyncpa [#allocation5], 0
    // Predicated region
    $region2: #{conv_lstm_forward.1} parent=1 // pred_check
      _
    $region3: #{conv_lstm_forward.1} parent=1 // pred_check_branch
      %19 = sbr.rel (0) target = $region5
    $region4: #{conv_lstm_forward.1} parent=1 // pred_region
      _
    $region5: #{conv_lstm_forward.1} parent=1 // pred_fallthru
      _
    // Predicated region
    $region6: #{conv_lstm_forward.1} parent=1 // pred_check
      _
    $region7: #{conv_lstm_forward.1} parent=1 // pred_check_branch
      %21 = sbr.rel (0) target = $region9
    $region8: #{conv_lstm_forward.1} parent=1 // pred_region
      _
    $region9: #{conv_lstm_forward.1} parent=1 // pred_fallthru
      _
    // Predicated region
    $region10: #{conv_lstm_forward.1} parent=1 // pred_check
      _
    $region11: #{conv_lstm_forward.1} parent=1 // pred_check_branch
      %23 = sbr.rel (0) target = $region13
    $region12: #{conv_lstm_forward.1} parent=1 // pred_region
      _
    $region13: #{conv_lstm_forward.1} parent=1 // pred_fallthru
      _
    // Predicated region
    $region14: #{conv_lstm_forward.1} parent=1 // pred_check
      _
    $region15: #{conv_lstm_forward.1} parent=1 // pred_check_branch
      %25 = sbr.rel (0) target = $region17
    $region16: #{conv_lstm_forward.1} parent=1 // pred_region
      _
    $region17: #{conv_lstm_forward.1} parent=1 // pred_fallthru
      _
    // Predicated region
    $region18: #{conv_lstm_forward.1} parent=1 // pred_check
      _
    $region19: #{conv_lstm_forward.1} parent=1 // pred_check_branch
      %27 = sbr.rel (0) target = $region21
    $region20: #{conv_lstm_forward.1} parent=1 // pred_region
      _
    $region21: #{conv_lstm_forward.1} parent=1 // pred_fallthru
      _
    // Predicated region
    $region22: #{conv_lstm_forward.1} parent=1 // pred_check
      _
    $region23: #{conv_lstm_forward.1} parent=1 // pred_check_branch
      %29 = sbr.rel (0) target = $region25
    $region24: #{conv_lstm_forward.1} parent=1 // pred_region
      %31 = vsyncadd [#allocation5], 0
      %s32 = sshll.u32 %s5, 4
      %s33 = int_to_ptr.hbm [resolvable:$true] %s32
      %s34 = sshll.u32 [#allocation4], 4
      %s35 = int_to_ptr.vmem [resolvable:$true] %s34
      %40 = dma.hbm_to_vmem [thread:$0]  %s33, 4096, %s35, [#allocation5], 512, 512, 32
    $region25: #{conv_lstm_forward.1} parent=1 // pred_fallthru
      _
    // Predicated region
    $region26: #{conv_lstm_forward.1} parent=1 // pred_check
      _
    $region27: #{conv_lstm_forward.1} parent=1 // pred_check_branch
      %42 = sbr.rel (0) target = $region29
    $region28: #{conv_lstm_forward.1} parent=1 // pred_region
      _
    $region29: #{conv_lstm_forward.1} parent=1 // pred_fallthru
      _
    // Predicated region
    $region30: #{conv_lstm_forward.1} parent=1 // pred_check
      _
    $region31: #{conv_lstm_forward.1} parent=1 // pred_check_branch
      %44 = sbr.rel (0) target = $region33
    $region32: #{conv_lstm_forward.1} parent=1 // pred_region
      _
    $region33: #{conv_lstm_forward.1} parent=1 // pred_fallthru
      _
    // Predicated region
    $region34: #{conv_lstm_forward.1} parent=1 // pred_check
      _
    $region35: #{conv_lstm_forward.1} parent=1 // pred_check_branch
      %46 = sbr.rel (0) target = $region37
    $region36: #{conv_lstm_forward.1} parent=1 // pred_region
      _
    $region37: #{conv_lstm_forward.1} parent=1 // pred_fallthru
      _
    // Predicated region
    $region38: #{conv_lstm_forward.1} parent=1 // pred_check
      _
    $region39: #{conv_lstm_forward.1} parent=1 // pred_check_branch
      %48 = sbr.rel (0) target = $region41
    $region40: #{conv_lstm_forward.1} parent=1 // pred_region
      _
    $region41: #{conv_lstm_forward.1} parent=1 // pred_fallthru
      _
    // Predicated region
    $region42: #{conv_lstm_forward.1} parent=1 // pred_check
      _
    $region43: #{conv_lstm_forward.1} parent=1 // pred_check_branch
      %50 = sbr.rel (0) target = $region45
    $region44: #{conv_lstm_forward.1} parent=1 // pred_region
      %52 = dma.done [#allocation5], 4096
    $region45: #{conv_lstm_forward.1} parent=1 // pred_fallthru
      _
    %v53 = vld [vmem:[%s0] sm:$0x3]
    %v54 = vld [vmem:[%s0 + $0x2] sm:$0x3]
    %v55 = vld [vmem:[%s0 + $0x4] sm:$0x3]
    %v56 = vld [vmem:[%s0 + $0x6] sm:$0x3]
    %v57 = vld [vmem:[%s0 + $0x8] sm:$0x3]
    %v58 = vld [vmem:[%s0 + $0xa] sm:$0x3]
    %v59 = vld [vmem:[%s0 + $0xc] sm:$0x3]
    %v60 = vld [vmem:[%s0 + $0xe] sm:$0x3]
    %v61 = vld [vmem:[%s1] sm:$0xff]
    %v62 = vld [vmem:[%s1 + $0x8] sm:$0xff]
    %v63 = vld [vmem:[%s1 + $0x10] sm:$0xff]
    %v64 = vld [vmem:[%s1 + $0x18] sm:$0xff]
    %v65 = vld [vmem:[%s1 + $0x20] sm:$0xff]
    %v66 = vld [vmem:[%s1 + $0x28] sm:$0xff]
    %v67 = vld [vmem:[%s1 + $0x30] sm:$0xff]
    %v68 = vld [vmem:[%s1 + $0x38] sm:$0x7f]
    %v69 = vld [vmem:[%s2] sm:$0x1]
    %v71 = vperm.slane %v69, 0
    %81 = vst [vmem:[#allocation1] ss:$4 sm:$0xff] %v53
    %s82 = scalar_lea.vmem [#allocation1], 1
    %83 = vst [vmem:[%s82] ss:$4 sm:$0xff] %v54
    %s84 = scalar_lea.vmem [#allocation1], 2
    %85 = vst [vmem:[%s84] ss:$4 sm:$0xff] %v55
    %s86 = scalar_lea.vmem [#allocation1], 3
    %87 = vst [vmem:[%s86] ss:$4 sm:$0xff] %v56
    %s88 = scalar_lea.vmem [#allocation1], 32
    %89 = vst [vmem:[%s88] ss:$4 sm:$0xff] %v57
    %s90 = scalar_lea.vmem [#allocation1], 33
    %91 = vst [vmem:[%s90] ss:$4 sm:$0xff] %v58
    %s92 = scalar_lea.vmem [#allocation1], 34
    %93 = vst [vmem:[%s92] ss:$4 sm:$0xff] %v59
    %s94 = scalar_lea.vmem [#allocation1], 35
    %95 = vst [vmem:[%s94] ss:$4 sm:$0xff] %v60
    %v96 = vld.sshfl [vmem:[#allocation1] sm:$0xff pattern:$0x73625140]
    %v97 = vld.sshfl [vmem:[#allocation1 + $0x20] sm:$0xff pattern:$0x73625140]
    %vm98 = vcmask 515072
    %v99 = vsel %vm98, %v96, 0
    %v101 = vsel %vm98, %v97, 0
    %vm103 = vcmask 1046528
    %v105 = vsel %vm103, %v68, 0
    %107 = vmatpush.msra.mxu0 0.0
    %108 = vmatpush.msra.mxu0 0.0
    %109 = vmatpush.msra.mxu0 0.0
    %110 = vmatpush.msra.mxu0 0.0
    %111 = vmatpush.msra.mxu0 0.0
    %112 = vmatpush.msra.mxu0 0.0
    %113 = vmatpush.msra.mxu0 0.0
    %114 = vmatpush.msra.mxu0 0.0
    %115 = vmatpush.msra.mxu0 %v105
    %116 = vmatpush.msra.mxu0 %v67
    %117 = vmatpush.msra.mxu0 %v66
    %118 = vmatpush.msra.mxu0 %v65
    %119 = vmatpush.msra.mxu0 %v64
    %120 = vmatpush.msra.mxu0 %v63
    %121 = vmatpush.msra.mxu0 %v62
    %122 = vmatpush.msra.mxu0 %v61
    %123 = vmatmul.f32.gmra.mxu0 %v99
    %v124 = vpop.f32.mrf.mxu0
    %v125 = vadd.f32 %v71, %v124
    %126 = vmatmul.f32.gmra.mxu0 %v101
    %v127 = vpop.f32.mrf.mxu0
    %v128 = vadd.f32 %v71, %v127
    %129 = vdwg.mxu0
    %v130 = vmax.f32 %v125, 0.0
    %v131 = vmax.f32 %v128, 0.0
    %v132 = vld [vmem:[%s3] sm:$0xff]
    %v133 = vld [vmem:[%s3 + $0x8] sm:$0xff]
    %v134 = vld [vmem:[%s3 + $0x10] sm:$0xff]
    %v135 = vld [vmem:[%s3 + $0x18] sm:$0xff]
    %v136 = vld [vmem:[%s3 + $0x20] sm:$0xff]
    %v137 = vld [vmem:[%s3 + $0x28] sm:$0xff]
    %v138 = vld [vmem:[%s3 + $0x30] sm:$0xff]
    %v139 = vld [vmem:[%s3 + $0x38] sm:$0xff]
    %v140 = vld [vmem:[%s4] sm:$0x3]
    %v142 = vperm.slane %v140, 0
    %v143 = vperm.slane %v140, 1
    %vm146 = vcmask 261120
    %v148 = vsel %vm146, %v130, 0
    %v151 = vsel %vm146, %v131, 0
    %153 = vmatpush.msra.mxu0 0.0
    %154 = vmatpush.msra.mxu0 0.0
    %155 = vmatpush.msra.mxu0 0.0
    %156 = vmatpush.msra.mxu0 0.0
    %157 = vmatpush.msra.mxu0 0.0
    %158 = vmatpush.msra.mxu0 0.0
    %159 = vmatpush.msra.mxu0 0.0
    %160 = vmatpush.msra.mxu0 0.0
    %161 = vmatpush.msra.mxu0 0.0
    %162 = vmatpush.msra.mxu0 0.0
    %163 = vmatpush.msra.mxu0 0.0
    %164 = vmatpush.msra.mxu0 0.0
    %165 = vmatpush.msra.mxu0 %v138
    %166 = vmatpush.msra.mxu0 %v136
    %167 = vmatpush.msra.mxu0 %v134
    %168 = vmatpush.msra.mxu0 %v132
    %169 = vmatmul.f32.gmra.mxu0 %v148
    %v170 = vpop.f32.mrf.mxu0
    %v171 = vadd.f32 %v142, %v170
    %172 = vmatmul.f32.gmra.mxu0 %v151
    %v173 = vpop.f32.mrf.mxu0
    %v174 = vadd.f32 %v142, %v173
    %175 = vdwg.mxu0
    %176 = vmatpush.msra.mxu0 0.0
    %177 = vmatpush.msra.mxu0 0.0
    %178 = vmatpush.msra.mxu0 0.0
    %179 = vmatpush.msra.mxu0 0.0
    %180 = vmatpush.msra.mxu0 0.0
    %181 = vmatpush.msra.mxu0 0.0
    %182 = vmatpush.msra.mxu0 0.0
    %183 = vmatpush.msra.mxu0 0.0
    %184 = vmatpush.msra.mxu0 0.0
    %185 = vmatpush.msra.mxu0 0.0
    %186 = vmatpush.msra.mxu0 0.0
    %187 = vmatpush.msra.mxu0 0.0
    %188 = vmatpush.msra.mxu0 %v139
    %189 = vmatpush.msra.mxu0 %v137
    %190 = vmatpush.msra.mxu0 %v135
    %191 = vmatpush.msra.mxu0 %v133
    %192 = vmatmul.f32.gmra.mxu0 %v148
    %v193 = vpop.f32.mrf.mxu0
    %v194 = vadd.f32 %v143, %v193
    %195 = vmatmul.f32.gmra.mxu0 %v151
    %v196 = vpop.f32.mrf.mxu0
    %v197 = vadd.f32 %v143, %v196
    %198 = vdwg.mxu0
    %v203 = vrot.slane %v194, 6
    %v204 = vrot.slane %v197, 6
    %vm205 = vcmask 1041408
    %v206 = vsel %vm205, %v171, %v203
    %vm207 = vcmask 1043458
    %v208 = vsel %vm207, %v171, %v203
    %v209 = vrot.slane %v208, 2
    %vm210 = vcmask 1045508
    %v211 = vsel %vm210, %v171, %v203
    %v212 = vrot.slane %v211, 4
    %vm213 = vcmask 1045504
    %v214 = vsel %vm213, %v203, %v171
    %v215 = vrot.slane %v214, 6
    %v216 = vsel %vm205, %v174, %v204
    %v217 = vsel %vm207, %v174, %v204
    %v218 = vrot.slane %v217, 2
    %v219 = vsel %vm210, %v174, %v204
    %v220 = vrot.slane %v219, 4
    %v221 = vsel %vm213, %v204, %v174
    %v222 = vrot.slane %v221, 6
    %231 = vst [vmem:[#allocation2] sm:$0xf] %v206
    %232 = vst [vmem:[#allocation2 + $0x4] sm:$0xf] %v209
    %233 = vst [vmem:[#allocation2 + $0x8] sm:$0xf] %v212
    %234 = vst [vmem:[#allocation2 + $0xc] sm:$0xf] %v215
    %235 = vst [vmem:[#allocation2 + $0x10] sm:$0xf] %v216
    %236 = vst [vmem:[#allocation2 + $0x14] sm:$0xf] %v218
    %237 = vst [vmem:[#allocation2 + $0x18] sm:$0xf] %v220
    %238 = vst [vmem:[#allocation2 + $0x1c] sm:$0xf] %v222
    %v239 = vld [vmem:[%s7] sm:$0x3]
    %v241 = vperm.slane %v239, 0
    %v242 = vperm.slane %v239, 1
    %v245 = vlaneseq
    %v246 = vand.u32 %v245, 127
    %v247 = vadd.s32 %v246, 128
    %vm248 = vcmp.ge.s32.totalorder %v246, 192
    %vm249 = vcmp.ge.s32.totalorder %v247, 192
    %v250 = vsel %vm248, 1.0, 0.5
    %v251 = vsel %vm249, 1.0, 0.5
    %v252 = vsel %vm248, 0.0, 0.5
    %v253 = vsel %vm249, 0.0, 0.5
    %v254 = vld [vmem:[#allocation2] sm:$0xf]
    %v255 = vadd.f32 %v254, 0.0
    %v258 = vrot.slane %v251, 6
    %v259 = vsel %vm205, %v250, %v258
    %v261 = vmul.f32 %v255, %v259
    %v262 = vtanh.pop %v261
    %264 = vst [vmem:[#allocation1] ss:$4 sm:$0xff] %v262
    %v265 = vld.sshfl [vmem:[#allocation1] sm:$0xff pattern:$0x73625140]
    %v266 = vld.sshfl [vmem:[#allocation1 + $0x8] sm:$0xff pattern:$0x73625140]
    %v269 = vmul.f32 %v250, %v265
    %v270 = vmul.f32 %v251, %v266
    %v271 = vadd.f32 %v252, %v269
    %v272 = vadd.f32 %v253, %v270
    %v273 = vmul.f32 %v271, 0.0
    %v274 = vmul.f32 %v271, %v272
    %276 = vrot.lane.b32.xlu0 %v274, 64
    %v277 = vpop.permute.xlu0 %276
    %v279 = vadd.f32 %v273, %v277
    %v280 = vtanh.pop %v279
    %v281 = vmul.f32 %v272, %v280
    %v282 = vld [vmem:[#allocation4] sm:$0xff]
    %v283 = vld [vmem:[#allocation4 + $0x8] sm:$0xff]
    %v284 = vld [vmem:[#allocation4 + $0x10] sm:$0xff]
    %v285 = vld [vmem:[#allocation4 + $0x18] sm:$0xff]
    %v286 = vld [vmem:[#allocation4 + $0x20] sm:$0xff]
    %v287 = vld [vmem:[#allocation4 + $0x28] sm:$0xff]
    %v288 = vld [vmem:[#allocation4 + $0x30] sm:$0xff]
    %v289 = vld [vmem:[#allocation4 + $0x38] sm:$0xff]
    %v290 = vld [vmem:[#allocation4 + $0x40] sm:$0xff]
    %v291 = vld [vmem:[#allocation4 + $0x48] sm:$0xff]
    %v292 = vld [vmem:[#allocation4 + $0x50] sm:$0xff]
    %v293 = vld [vmem:[#allocation4 + $0x58] sm:$0xff]
    %v294 = vld [vmem:[#allocation4 + $0x60] sm:$0xff]
    %v295 = vld [vmem:[#allocation4 + $0x68] sm:$0xff]
    %v296 = vld [vmem:[#allocation4 + $0x70] sm:$0xff]
    %v297 = vld [vmem:[#allocation4 + $0x78] sm:$0xff]
    %v298 = vld [vmem:[#allocation4 + $0x80] sm:$0xff]
    %v299 = vld [vmem:[#allocation4 + $0x88] sm:$0xff]
    %v300 = vld [vmem:[#allocation4 + $0x90] sm:$0xff]
    %v301 = vld [vmem:[#allocation4 + $0x98] sm:$0xff]
    %v302 = vld [vmem:[#allocation4 + $0xa0] sm:$0xff]
    %v303 = vld [vmem:[#allocation4 + $0xa8] sm:$0xff]
    %v304 = vld [vmem:[#allocation4 + $0xb0] sm:$0xff]
    %v305 = vld [vmem:[#allocation4 + $0xb8] sm:$0xff]
    %v306 = vld [vmem:[#allocation4 + $0xc0] sm:$0xff]
    %v307 = vld [vmem:[#allocation4 + $0xc8] sm:$0xff]
    %v308 = vld [vmem:[#allocation4 + $0xd0] sm:$0xff]
    %v309 = vld [vmem:[#allocation4 + $0xd8] sm:$0xff]
    %v310 = vld [vmem:[#allocation4 + $0xe0] sm:$0xff]
    %v311 = vld [vmem:[#allocation4 + $0xe8] sm:$0xff]
    %v312 = vld [vmem:[#allocation4 + $0xf0] sm:$0xff]
    %v313 = vld [vmem:[#allocation4 + $0xf8] sm:$0xff]
    %vm314 = vcmask 523264
    %v316 = vsel %vm314, %v281, 0
    %318 = vmatpush.msra.mxu0 0.0
    %319 = vmatpush.msra.mxu0 0.0
    %320 = vmatpush.msra.mxu0 0.0
    %321 = vmatpush.msra.mxu0 0.0
    %322 = vmatpush.msra.mxu0 0.0
    %323 = vmatpush.msra.mxu0 0.0
    %324 = vmatpush.msra.mxu0 0.0
    %325 = vmatpush.msra.mxu0 0.0
    %326 = vmatpush.msra.mxu0 %v310
    %327 = vmatpush.msra.mxu0 %v306
    %328 = vmatpush.msra.mxu0 %v302
    %329 = vmatpush.msra.mxu0 %v298
    %330 = vmatpush.msra.mxu0 %v294
    %331 = vmatpush.msra.mxu0 %v290
    %332 = vmatpush.msra.mxu0 %v286
    %333 = vmatpush.msra.mxu0 %v282
    %334 = vmatmul.f32.gmra.mxu0 %v316
    %v335 = vpop.f32.mrf.mxu0
    %v336 = vadd.f32 0.0, %v335
    %337 = vdwg.mxu0
    %338 = vmatpush.msra.mxu0 0.0
    %339 = vmatpush.msra.mxu0 0.0
    %340 = vmatpush.msra.mxu0 0.0
    %341 = vmatpush.msra.mxu0 0.0
    %342 = vmatpush.msra.mxu0 0.0
    %343 = vmatpush.msra.mxu0 0.0
    %344 = vmatpush.msra.mxu0 0.0
    %345 = vmatpush.msra.mxu0 0.0
    %346 = vmatpush.msra.mxu0 %v311
    %347 = vmatpush.msra.mxu0 %v307
    %348 = vmatpush.msra.mxu0 %v303
    %349 = vmatpush.msra.mxu0 %v299
    %350 = vmatpush.msra.mxu0 %v295
    %351 = vmatpush.msra.mxu0 %v291
    %352 = vmatpush.msra.mxu0 %v287
    %353 = vmatpush.msra.mxu0 %v283
    %354 = vmatmul.f32.gmra.mxu0 %v316
    %v355 = vpop.f32.mrf.mxu0
    %v356 = vadd.f32 0.0, %v355
    %357 = vdwg.mxu0
    %358 = vmatpush.msra.mxu0 0.0
    %359 = vmatpush.msra.mxu0 0.0
    %360 = vmatpush.msra.mxu0 0.0
    %361 = vmatpush.msra.mxu0 0.0
    %362 = vmatpush.msra.mxu0 0.0
    %363 = vmatpush.msra.mxu0 0.0
    %364 = vmatpush.msra.mxu0 0.0
    %365 = vmatpush.msra.mxu0 0.0
    %366 = vmatpush.msra.mxu0 %v312
    %367 = vmatpush.msra.mxu0 %v308
    %368 = vmatpush.msra.mxu0 %v304
    %369 = vmatpush.msra.mxu0 %v300
    %370 = vmatpush.msra.mxu0 %v296
    %371 = vmatpush.msra.mxu0 %v292
    %372 = vmatpush.msra.mxu0 %v288
    %373 = vmatpush.msra.mxu0 %v284
    %374 = vmatmul.f32.gmra.mxu0 %v316
    %v375 = vpop.f32.mrf.mxu0
    %v376 = vadd.f32 0.0, %v375
    %377 = vdwg.mxu0
    %378 = vmatpush.msra.mxu0 0.0
    %379 = vmatpush.msra.mxu0 0.0
    %380 = vmatpush.msra.mxu0 0.0
    %381 = vmatpush.msra.mxu0 0.0
    %382 = vmatpush.msra.mxu0 0.0
    %383 = vmatpush.msra.mxu0 0.0
    %384 = vmatpush.msra.mxu0 0.0
    %385 = vmatpush.msra.mxu0 0.0
    %386 = vmatpush.msra.mxu0 %v313
    %387 = vmatpush.msra.mxu0 %v309
    %388 = vmatpush.msra.mxu0 %v305
    %389 = vmatpush.msra.mxu0 %v301
    %390 = vmatpush.msra.mxu0 %v297
    %391 = vmatpush.msra.mxu0 %v293
    %392 = vmatpush.msra.mxu0 %v289
    %393 = vmatpush.msra.mxu0 %v285
    %394 = vmatmul.f32.gmra.mxu0 %v316
    %v395 = vpop.f32.mrf.mxu0
    %v396 = vadd.f32 0.0, %v395
    %397 = vdwg.mxu0
    %v398 = vadd.f32 %v376, 0.0
    %v399 = vadd.f32 %v396, 0.0
    %v400 = vadd.f32 %v398, %v241
    %v401 = vadd.f32 %v399, %v242
    %v402 = vmul.f32 %v400, %v250
    %v403 = vmul.f32 %v401, %v251
    %v404 = vtanh.pop %v402
    %v405 = vtanh.pop %v403
    %v406 = vmul.f32 %v250, %v404
    %v407 = vmul.f32 %v251, %v405
    %v408 = vadd.f32 %v252, %v406
    %v409 = vadd.f32 %v253, %v407
    %v410 = vmul.f32 %v408, 0.0
    %v411 = vmul.f32 %v408, %v409
    %413 = vrot.lane.b32.xlu0 %v411, 64
    %v414 = vpop.permute.xlu0 %413
    %v416 = vadd.f32 %v410, %v414
    %v417 = vtanh.pop %v416
    %v418 = vmul.f32 %v409, %v417
    %v419 = vld [vmem:[%s6] sm:$0xff]
    %v420 = vld [vmem:[%s6 + $0x8] sm:$0xff]
    %v421 = vld [vmem:[%s6 + $0x10] sm:$0xff]
    %v422 = vld [vmem:[%s6 + $0x18] sm:$0xff]
    %v423 = vld [vmem:[%s6 + $0x20] sm:$0xff]
    %v424 = vld [vmem:[%s6 + $0x28] sm:$0xff]
    %v425 = vld [vmem:[%s6 + $0x30] sm:$0xff]
    %v426 = vld [vmem:[%s6 + $0x38] sm:$0xff]
    %v427 = vld [vmem:[%s6 + $0x40] sm:$0xff]
    %v428 = vld [vmem:[%s6 + $0x48] sm:$0xff]
    %v429 = vld [vmem:[%s6 + $0x50] sm:$0xff]
    %v430 = vld [vmem:[%s6 + $0x58] sm:$0xff]
    %v431 = vld [vmem:[%s6 + $0x60] sm:$0xff]
    %v432 = vld [vmem:[%s6 + $0x68] sm:$0xff]
    %v433 = vld [vmem:[%s6 + $0x70] sm:$0xff]
    %v434 = vld [vmem:[%s6 + $0x78] sm:$0xff]
    %v436 = vsel %vm314, %v418, 0
    %438 = vmatpush.msra.mxu0 0.0
    %439 = vmatpush.msra.mxu0 0.0
    %440 = vmatpush.msra.mxu0 0.0
    %441 = vmatpush.msra.mxu0 0.0
    %442 = vmatpush.msra.mxu0 0.0
    %443 = vmatpush.msra.mxu0 0.0
    %444 = vmatpush.msra.mxu0 0.0
    %445 = vmatpush.msra.mxu0 0.0
    %446 = vmatpush.msra.mxu0 %v433
    %447 = vmatpush.msra.mxu0 %v431
    %448 = vmatpush.msra.mxu0 %v429
    %449 = vmatpush.msra.mxu0 %v427
    %450 = vmatpush.msra.mxu0 %v425
    %451 = vmatpush.msra.mxu0 %v423
    %452 = vmatpush.msra.mxu0 %v421
    %453 = vmatpush.msra.mxu0 %v419
    %454 = vmatmul.f32.gmra.mxu0 %v436
    %v455 = vpop.f32.mrf.mxu0
    %v456 = vadd.f32 0.0, %v455
    %457 = vdwg.mxu0
    %458 = vmatpush.msra.mxu0 0.0
    %459 = vmatpush.msra.mxu0 0.0
    %460 = vmatpush.msra.mxu0 0.0
    %461 = vmatpush.msra.mxu0 0.0
    %462 = vmatpush.msra.mxu0 0.0
    %463 = vmatpush.msra.mxu0 0.0
    %464 = vmatpush.msra.mxu0 0.0
    %465 = vmatpush.msra.mxu0 0.0
    %466 = vmatpush.msra.mxu0 %v434
    %467 = vmatpush.msra.mxu0 %v432
    %468 = vmatpush.msra.mxu0 %v430
    %469 = vmatpush.msra.mxu0 %v428
    %470 = vmatpush.msra.mxu0 %v426
    %471 = vmatpush.msra.mxu0 %v424
    %472 = vmatpush.msra.mxu0 %v422
    %473 = vmatpush.msra.mxu0 %v420
    %474 = vmatmul.f32.gmra.mxu0 %v436
    %v475 = vpop.f32.mrf.mxu0
    %v476 = vadd.f32 0.0, %v475
    %477 = vdwg.mxu0
    %s478 = scalar_lea.vmem [#allocation2], 4
    %v479 = vld [vmem:[%s478] sm:$0xf]
    %v482 = vrot.slane %v356, 6
    %v483 = vsel %vm205, %v336, %v482
    %v485 = vadd.f32 %v479, %v483
    %v486 = vmul.f32 %v485, %v259
    %v487 = vtanh.pop %v486
    %489 = vst [vmem:[#allocation1] ss:$4 sm:$0xff] %v487
    %v490 = vld.sshfl [vmem:[#allocation1] sm:$0xff pattern:$0x73625140]
    %v491 = vld.sshfl [vmem:[#allocation1 + $0x8] sm:$0xff pattern:$0x73625140]
    %v494 = vmul.f32 %v250, %v490
    %v495 = vmul.f32 %v251, %v491
    %v496 = vadd.f32 %v252, %v494
    %v497 = vadd.f32 %v253, %v495
    %v498 = vmul.f32 %v496, %v279
    %v499 = vmul.f32 %v496, %v497
    %501 = vrot.lane.b32.xlu0 %v499, 64
    %v502 = vpop.permute.xlu0 %501
    %v504 = vadd.f32 %v498, %v502
    %v505 = vtanh.pop %v504
    %v506 = vmul.f32 %v497, %v505
    %v508 = vsel %vm314, %v506, 0
    %510 = vmatpush.msra.mxu0 0.0
    %511 = vmatpush.msra.mxu0 0.0
    %512 = vmatpush.msra.mxu0 0.0
    %513 = vmatpush.msra.mxu0 0.0
    %514 = vmatpush.msra.mxu0 0.0
    %515 = vmatpush.msra.mxu0 0.0
    %516 = vmatpush.msra.mxu0 0.0
    %517 = vmatpush.msra.mxu0 0.0
    %518 = vmatpush.msra.mxu0 %v310
    %519 = vmatpush.msra.mxu0 %v306
    %520 = vmatpush.msra.mxu0 %v302
    %521 = vmatpush.msra.mxu0 %v298
    %522 = vmatpush.msra.mxu0 %v294
    %523 = vmatpush.msra.mxu0 %v290
    %524 = vmatpush.msra.mxu0 %v286
    %525 = vmatpush.msra.mxu0 %v282
    %526 = vmatmul.f32.gmra.mxu0 %v508
    %v527 = vpop.f32.mrf.mxu0
    %v528 = vadd.f32 0.0, %v527
    %529 = vdwg.mxu0
    %530 = vmatpush.msra.mxu0 0.0
    %531 = vmatpush.msra.mxu0 0.0
    %532 = vmatpush.msra.mxu0 0.0
    %533 = vmatpush.msra.mxu0 0.0
    %534 = vmatpush.msra.mxu0 0.0
    %535 = vmatpush.msra.mxu0 0.0
    %536 = vmatpush.msra.mxu0 0.0
    %537 = vmatpush.msra.mxu0 0.0
    %538 = vmatpush.msra.mxu0 %v311
    %539 = vmatpush.msra.mxu0 %v307
    %540 = vmatpush.msra.mxu0 %v303
    %541 = vmatpush.msra.mxu0 %v299
    %542 = vmatpush.msra.mxu0 %v295
    %543 = vmatpush.msra.mxu0 %v291
    %544 = vmatpush.msra.mxu0 %v287
    %545 = vmatpush.msra.mxu0 %v283
    %546 = vmatmul.f32.gmra.mxu0 %v508
    %v547 = vpop.f32.mrf.mxu0
    %v548 = vadd.f32 0.0, %v547
    %549 = vdwg.mxu0
    %550 = vmatpush.msra.mxu0 0.0
    %551 = vmatpush.msra.mxu0 0.0
    %552 = vmatpush.msra.mxu0 0.0
    %553 = vmatpush.msra.mxu0 0.0
    %554 = vmatpush.msra.mxu0 0.0
    %555 = vmatpush.msra.mxu0 0.0
    %556 = vmatpush.msra.mxu0 0.0
    %557 = vmatpush.msra.mxu0 0.0
    %558 = vmatpush.msra.mxu0 %v312
    %559 = vmatpush.msra.mxu0 %v308
    %560 = vmatpush.msra.mxu0 %v304
    %561 = vmatpush.msra.mxu0 %v300
    %562 = vmatpush.msra.mxu0 %v296
    %563 = vmatpush.msra.mxu0 %v292
    %564 = vmatpush.msra.mxu0 %v288
    %565 = vmatpush.msra.mxu0 %v284
    %566 = vmatmul.f32.gmra.mxu0 %v508
    %v567 = vpop.f32.mrf.mxu0
    %v568 = vadd.f32 0.0, %v567
    %569 = vdwg.mxu0
    %570 = vmatpush.msra.mxu0 0.0
    %571 = vmatpush.msra.mxu0 0.0
    %572 = vmatpush.msra.mxu0 0.0
    %573 = vmatpush.msra.mxu0 0.0
    %574 = vmatpush.msra.mxu0 0.0
    %575 = vmatpush.msra.mxu0 0.0
    %576 = vmatpush.msra.mxu0 0.0
    %577 = vmatpush.msra.mxu0 0.0
    %578 = vmatpush.msra.mxu0 %v313
    %579 = vmatpush.msra.mxu0 %v309
    %580 = vmatpush.msra.mxu0 %v305
    %581 = vmatpush.msra.mxu0 %v301
    %582 = vmatpush.msra.mxu0 %v297
    %583 = vmatpush.msra.mxu0 %v293
    %584 = vmatpush.msra.mxu0 %v289
    %585 = vmatpush.msra.mxu0 %v285
    %586 = vmatmul.f32.gmra.mxu0 %v508
    %v587 = vpop.f32.mrf.mxu0
    %v588 = vadd.f32 0.0, %v587
    %589 = vdwg.mxu0
    %v590 = vadd.f32 %v568, %v456
    %v591 = vadd.f32 %v588, %v476
    %v592 = vadd.f32 %v590, %v241
    %v593 = vadd.f32 %v591, %v242
    %v594 = vmul.f32 %v592, %v250
    %v595 = vmul.f32 %v593, %v251
    %v596 = vtanh.pop %v594
    %v597 = vtanh.pop %v595
    %v598 = vmul.f32 %v250, %v596
    %v599 = vmul.f32 %v251, %v597
    %v600 = vadd.f32 %v252, %v598
    %v601 = vadd.f32 %v253, %v599
    %v602 = vmul.f32 %v600, %v416
    %v603 = vmul.f32 %v600, %v601
    %605 = vrot.lane.b32.xlu0 %v603, 64
    %v606 = vpop.permute.xlu0 %605
    %v608 = vadd.f32 %v602, %v606
    %v609 = vtanh.pop %v608
    %v610 = vmul.f32 %v601, %v609
    %v612 = vsel %vm314, %v610, 0
    %614 = vmatpush.msra.mxu0 0.0
    %615 = vmatpush.msra.mxu0 0.0
    %616 = vmatpush.msra.mxu0 0.0
    %617 = vmatpush.msra.mxu0 0.0
    %618 = vmatpush.msra.mxu0 0.0
    %619 = vmatpush.msra.mxu0 0.0
    %620 = vmatpush.msra.mxu0 0.0
    %621 = vmatpush.msra.mxu0 0.0
    %622 = vmatpush.msra.mxu0 %v433
    %623 = vmatpush.msra.mxu0 %v431
    %624 = vmatpush.msra.mxu0 %v429
    %625 = vmatpush.msra.mxu0 %v427
    %626 = vmatpush.msra.mxu0 %v425
    %627 = vmatpush.msra.mxu0 %v423
    %628 = vmatpush.msra.mxu0 %v421
    %629 = vmatpush.msra.mxu0 %v419
    %630 = vmatmul.f32.gmra.mxu0 %v612
    %v631 = vpop.f32.mrf.mxu0
    %v632 = vadd.f32 0.0, %v631
    %633 = vdwg.mxu0
    %634 = vmatpush.msra.mxu0 0.0
    %635 = vmatpush.msra.mxu0 0.0
    %636 = vmatpush.msra.mxu0 0.0
    %637 = vmatpush.msra.mxu0 0.0
    %638 = vmatpush.msra.mxu0 0.0
    %639 = vmatpush.msra.mxu0 0.0
    %640 = vmatpush.msra.mxu0 0.0
    %641 = vmatpush.msra.mxu0 0.0
    %642 = vmatpush.msra.mxu0 %v434
    %643 = vmatpush.msra.mxu0 %v432
    %644 = vmatpush.msra.mxu0 %v430
    %645 = vmatpush.msra.mxu0 %v428
    %646 = vmatpush.msra.mxu0 %v426
    %647 = vmatpush.msra.mxu0 %v424
    %648 = vmatpush.msra.mxu0 %v422
    %649 = vmatpush.msra.mxu0 %v420
    %650 = vmatmul.f32.gmra.mxu0 %v612
    %v651 = vpop.f32.mrf.mxu0
    %v652 = vadd.f32 0.0, %v651
    %653 = vdwg.mxu0
    %s654 = scalar_lea.vmem [#allocation2], 8
    %v655 = vld [vmem:[%s654] sm:$0xf]
    %v658 = vrot.slane %v548, 6
    %v659 = vsel %vm205, %v528, %v658
    %v661 = vadd.f32 %v655, %v659
    %v662 = vmul.f32 %v661, %v259
    %v663 = vtanh.pop %v662
    %665 = vst [vmem:[#allocation1] ss:$4 sm:$0xff] %v663
    %v666 = vld.sshfl [vmem:[#allocation1] sm:$0xff pattern:$0x73625140]
    %v667 = vld.sshfl [vmem:[#allocation1 + $0x8] sm:$0xff pattern:$0x73625140]
    %v670 = vmul.f32 %v250, %v666
    %v671 = vmul.f32 %v251, %v667
    %v672 = vadd.f32 %v252, %v670
    %v673 = vadd.f32 %v253, %v671
    %v674 = vmul.f32 %v672, %v504
    %v675 = vmul.f32 %v672, %v673
    %677 = vrot.lane.b32.xlu0 %v675, 64
    %v678 = vpop.permute.xlu0 %677
    %v680 = vadd.f32 %v674, %v678
    %v681 = vtanh.pop %v680
    %v682 = vmul.f32 %v673, %v681
    %v684 = vsel %vm314, %v682, 0
    %686 = vmatpush.msra.mxu0 0.0
    %687 = vmatpush.msra.mxu0 0.0
    %688 = vmatpush.msra.mxu0 0.0
    %689 = vmatpush.msra.mxu0 0.0
    %690 = vmatpush.msra.mxu0 0.0
    %691 = vmatpush.msra.mxu0 0.0
    %692 = vmatpush.msra.mxu0 0.0
    %693 = vmatpush.msra.mxu0 0.0
    %694 = vmatpush.msra.mxu0 %v310
    %695 = vmatpush.msra.mxu0 %v306
    %696 = vmatpush.msra.mxu0 %v302
    %697 = vmatpush.msra.mxu0 %v298
    %698 = vmatpush.msra.mxu0 %v294
    %699 = vmatpush.msra.mxu0 %v290
    %700 = vmatpush.msra.mxu0 %v286
    %701 = vmatpush.msra.mxu0 %v282
    %702 = vmatmul.f32.gmra.mxu0 %v684
    %v703 = vpop.f32.mrf.mxu0
    %v704 = vadd.f32 0.0, %v703
    %705 = vdwg.mxu0
    %706 = vmatpush.msra.mxu0 0.0
    %707 = vmatpush.msra.mxu0 0.0
    %708 = vmatpush.msra.mxu0 0.0
    %709 = vmatpush.msra.mxu0 0.0
    %710 = vmatpush.msra.mxu0 0.0
    %711 = vmatpush.msra.mxu0 0.0
    %712 = vmatpush.msra.mxu0 0.0
    %713 = vmatpush.msra.mxu0 0.0
    %714 = vmatpush.msra.mxu0 %v311
    %715 = vmatpush.msra.mxu0 %v307
    %716 = vmatpush.msra.mxu0 %v303
    %717 = vmatpush.msra.mxu0 %v299
    %718 = vmatpush.msra.mxu0 %v295
    %719 = vmatpush.msra.mxu0 %v291
    %720 = vmatpush.msra.mxu0 %v287
    %721 = vmatpush.msra.mxu0 %v283
    %722 = vmatmul.f32.gmra.mxu0 %v684
    %v723 = vpop.f32.mrf.mxu0
    %v724 = vadd.f32 0.0, %v723
    %725 = vdwg.mxu0
    %726 = vmatpush.msra.mxu0 0.0
    %727 = vmatpush.msra.mxu0 0.0
    %728 = vmatpush.msra.mxu0 0.0
    %729 = vmatpush.msra.mxu0 0.0
    %730 = vmatpush.msra.mxu0 0.0
    %731 = vmatpush.msra.mxu0 0.0
    %732 = vmatpush.msra.mxu0 0.0
    %733 = vmatpush.msra.mxu0 0.0
    %734 = vmatpush.msra.mxu0 %v312
    %735 = vmatpush.msra.mxu0 %v308
    %736 = vmatpush.msra.mxu0 %v304
    %737 = vmatpush.msra.mxu0 %v300
    %738 = vmatpush.msra.mxu0 %v296
    %739 = vmatpush.msra.mxu0 %v292
    %740 = vmatpush.msra.mxu0 %v288
    %741 = vmatpush.msra.mxu0 %v284
    %742 = vmatmul.f32.gmra.mxu0 %v684
    %v743 = vpop.f32.mrf.mxu0
    %v744 = vadd.f32 0.0, %v743
    %745 = vdwg.mxu0
    %746 = vmatpush.msra.mxu0 0.0
    %747 = vmatpush.msra.mxu0 0.0
    %748 = vmatpush.msra.mxu0 0.0
    %749 = vmatpush.msra.mxu0 0.0
    %750 = vmatpush.msra.mxu0 0.0
    %751 = vmatpush.msra.mxu0 0.0
    %752 = vmatpush.msra.mxu0 0.0
    %753 = vmatpush.msra.mxu0 0.0
    %754 = vmatpush.msra.mxu0 %v313
    %755 = vmatpush.msra.mxu0 %v309
    %756 = vmatpush.msra.mxu0 %v305
    %757 = vmatpush.msra.mxu0 %v301
    %758 = vmatpush.msra.mxu0 %v297
    %759 = vmatpush.msra.mxu0 %v293
    %760 = vmatpush.msra.mxu0 %v289
    %761 = vmatpush.msra.mxu0 %v285
    %762 = vmatmul.f32.gmra.mxu0 %v684
    %v763 = vpop.f32.mrf.mxu0
    %v764 = vadd.f32 0.0, %v763
    %765 = vdwg.mxu0
    %v766 = vadd.f32 %v744, %v632
    %v767 = vadd.f32 %v764, %v652
    %v768 = vadd.f32 %v766, %v241
    %v769 = vadd.f32 %v767, %v242
    %v770 = vmul.f32 %v768, %v250
    %v771 = vmul.f32 %v769, %v251
    %v772 = vtanh.pop %v770
    %v773 = vtanh.pop %v771
    %v774 = vmul.f32 %v250, %v772
    %v775 = vmul.f32 %v251, %v773
    %v776 = vadd.f32 %v252, %v774
    %v777 = vadd.f32 %v253, %v775
    %v778 = vmul.f32 %v776, %v608
    %v779 = vmul.f32 %v776, %v777
    %781 = vrot.lane.b32.xlu0 %v779, 64
    %v782 = vpop.permute.xlu0 %781
    %v784 = vadd.f32 %v778, %v782
    %v785 = vtanh.pop %v784
    %v786 = vmul.f32 %v777, %v785
    %v788 = vsel %vm314, %v786, 0
    %790 = vmatpush.msra.mxu0 0.0
    %791 = vmatpush.msra.mxu0 0.0
    %792 = vmatpush.msra.mxu0 0.0
    %793 = vmatpush.msra.mxu0 0.0
    %794 = vmatpush.msra.mxu0 0.0
    %795 = vmatpush.msra.mxu0 0.0
    %796 = vmatpush.msra.mxu0 0.0
    %797 = vmatpush.msra.mxu0 0.0
    %798 = vmatpush.msra.mxu0 %v433
    %799 = vmatpush.msra.mxu0 %v431
    %800 = vmatpush.msra.mxu0 %v429
    %801 = vmatpush.msra.mxu0 %v427
    %802 = vmatpush.msra.mxu0 %v425
    %803 = vmatpush.msra.mxu0 %v423
    %804 = vmatpush.msra.mxu0 %v421
    %805 = vmatpush.msra.mxu0 %v419
    %806 = vmatmul.f32.gmra.mxu0 %v788
    %v807 = vpop.f32.mrf.mxu0
    %v808 = vadd.f32 0.0, %v807
    %809 = vdwg.mxu0
    %810 = vmatpush.msra.mxu0 0.0
    %811 = vmatpush.msra.mxu0 0.0
    %812 = vmatpush.msra.mxu0 0.0
    %813 = vmatpush.msra.mxu0 0.0
    %814 = vmatpush.msra.mxu0 0.0
    %815 = vmatpush.msra.mxu0 0.0
    %816 = vmatpush.msra.mxu0 0.0
    %817 = vmatpush.msra.mxu0 0.0
    %818 = vmatpush.msra.mxu0 %v434
    %819 = vmatpush.msra.mxu0 %v432
    %820 = vmatpush.msra.mxu0 %v430
    %821 = vmatpush.msra.mxu0 %v428
    %822 = vmatpush.msra.mxu0 %v426
    %823 = vmatpush.msra.mxu0 %v424
    %824 = vmatpush.msra.mxu0 %v422
    %825 = vmatpush.msra.mxu0 %v420
    %826 = vmatmul.f32.gmra.mxu0 %v788
    %v827 = vpop.f32.mrf.mxu0
    %v828 = vadd.f32 0.0, %v827
    %829 = vdwg.mxu0
    %s830 = scalar_lea.vmem [#allocation2], 12
    %v831 = vld [vmem:[%s830] sm:$0xf]
    %v834 = vrot.slane %v724, 6
    %v835 = vsel %vm205, %v704, %v834
    %v837 = vadd.f32 %v831, %v835
    %v838 = vmul.f32 %v837, %v259
    %v839 = vtanh.pop %v838
    %841 = vst [vmem:[#allocation1] ss:$4 sm:$0xff] %v839
    %v842 = vld.sshfl [vmem:[#allocation1] sm:$0xff pattern:$0x73625140]
    %v843 = vld.sshfl [vmem:[#allocation1 + $0x8] sm:$0xff pattern:$0x73625140]
    %v846 = vmul.f32 %v250, %v842
    %v847 = vmul.f32 %v251, %v843
    %v848 = vadd.f32 %v252, %v846
    %v849 = vadd.f32 %v253, %v847
    %v850 = vmul.f32 %v848, %v680
    %v851 = vmul.f32 %v848, %v849
    %853 = vrot.lane.b32.xlu0 %v851, 64
    %v854 = vpop.permute.xlu0 %853
    %v856 = vadd.f32 %v850, %v854
    %v857 = vtanh.pop %v856
    %v858 = vmul.f32 %v849, %v857
    %v860 = vsel %vm314, %v858, 0
    %862 = vmatpush.msra.mxu0 0.0
    %863 = vmatpush.msra.mxu0 0.0
    %864 = vmatpush.msra.mxu0 0.0
    %865 = vmatpush.msra.mxu0 0.0
    %866 = vmatpush.msra.mxu0 0.0
    %867 = vmatpush.msra.mxu0 0.0
    %868 = vmatpush.msra.mxu0 0.0
    %869 = vmatpush.msra.mxu0 0.0
    %870 = vmatpush.msra.mxu0 %v310
    %871 = vmatpush.msra.mxu0 %v306
    %872 = vmatpush.msra.mxu0 %v302
    %873 = vmatpush.msra.mxu0 %v298
    %874 = vmatpush.msra.mxu0 %v294
    %875 = vmatpush.msra.mxu0 %v290
    %876 = vmatpush.msra.mxu0 %v286
    %877 = vmatpush.msra.mxu0 %v282
    %878 = vmatmul.f32.gmra.mxu0 %v860
    %v879 = vpop.f32.mrf.mxu0
    %v880 = vadd.f32 0.0, %v879
    %881 = vdwg.mxu0
    %882 = vmatpush.msra.mxu0 0.0
    %883 = vmatpush.msra.mxu0 0.0
    %884 = vmatpush.msra.mxu0 0.0
    %885 = vmatpush.msra.mxu0 0.0
    %886 = vmatpush.msra.mxu0 0.0
    %887 = vmatpush.msra.mxu0 0.0
    %888 = vmatpush.msra.mxu0 0.0
    %889 = vmatpush.msra.mxu0 0.0
    %890 = vmatpush.msra.mxu0 %v311
    %891 = vmatpush.msra.mxu0 %v307
    %892 = vmatpush.msra.mxu0 %v303
    %893 = vmatpush.msra.mxu0 %v299
    %894 = vmatpush.msra.mxu0 %v295
    %895 = vmatpush.msra.mxu0 %v291
    %896 = vmatpush.msra.mxu0 %v287
    %897 = vmatpush.msra.mxu0 %v283
    %898 = vmatmul.f32.gmra.mxu0 %v860
    %v899 = vpop.f32.mrf.mxu0
    %v900 = vadd.f32 0.0, %v899
    %901 = vdwg.mxu0
    %902 = vmatpush.msra.mxu0 0.0
    %903 = vmatpush.msra.mxu0 0.0
    %904 = vmatpush.msra.mxu0 0.0
    %905 = vmatpush.msra.mxu0 0.0
    %906 = vmatpush.msra.mxu0 0.0
    %907 = vmatpush.msra.mxu0 0.0
    %908 = vmatpush.msra.mxu0 0.0
    %909 = vmatpush.msra.mxu0 0.0
    %910 = vmatpush.msra.mxu0 %v312
    %911 = vmatpush.msra.mxu0 %v308
    %912 = vmatpush.msra.mxu0 %v304
    %913 = vmatpush.msra.mxu0 %v300
    %914 = vmatpush.msra.mxu0 %v296
    %915 = vmatpush.msra.mxu0 %v292
    %916 = vmatpush.msra.mxu0 %v288
    %917 = vmatpush.msra.mxu0 %v284
    %918 = vmatmul.f32.gmra.mxu0 %v860
    %v919 = vpop.f32.mrf.mxu0
    %v920 = vadd.f32 0.0, %v919
    %921 = vdwg.mxu0
    %922 = vmatpush.msra.mxu0 0.0
    %923 = vmatpush.msra.mxu0 0.0
    %924 = vmatpush.msra.mxu0 0.0
    %925 = vmatpush.msra.mxu0 0.0
    %926 = vmatpush.msra.mxu0 0.0
    %927 = vmatpush.msra.mxu0 0.0
    %928 = vmatpush.msra.mxu0 0.0
    %929 = vmatpush.msra.mxu0 0.0
    %930 = vmatpush.msra.mxu0 %v313
    %931 = vmatpush.msra.mxu0 %v309
    %932 = vmatpush.msra.mxu0 %v305
    %933 = vmatpush.msra.mxu0 %v301
    %934 = vmatpush.msra.mxu0 %v297
    %935 = vmatpush.msra.mxu0 %v293
    %936 = vmatpush.msra.mxu0 %v289
    %937 = vmatpush.msra.mxu0 %v285
    %938 = vmatmul.f32.gmra.mxu0 %v860
    %v939 = vpop.f32.mrf.mxu0
    %v940 = vadd.f32 0.0, %v939
    %941 = vdwg.mxu0
    %v942 = vadd.f32 %v920, %v808
    %v943 = vadd.f32 %v940, %v828
    %v944 = vadd.f32 %v942, %v241
    %v945 = vadd.f32 %v943, %v242
    %v946 = vmul.f32 %v944, %v250
    %v947 = vmul.f32 %v945, %v251
    %v948 = vtanh.pop %v946
    %v949 = vtanh.pop %v947
    %v950 = vmul.f32 %v250, %v948
    %v951 = vmul.f32 %v251, %v949
    %v952 = vadd.f32 %v252, %v950
    %v953 = vadd.f32 %v253, %v951
    %v954 = vmul.f32 %v952, %v784
    %v955 = vmul.f32 %v952, %v953
    %957 = vrot.lane.b32.xlu0 %v955, 64
    %v958 = vpop.permute.xlu0 %957
    %v960 = vadd.f32 %v954, %v958
    %v961 = vtanh.pop %v960
    %v962 = vmul.f32 %v953, %v961
    %v964 = vsel %vm314, %v962, 0
    %966 = vmatpush.msra.mxu0 0.0
    %967 = vmatpush.msra.mxu0 0.0
    %968 = vmatpush.msra.mxu0 0.0
    %969 = vmatpush.msra.mxu0 0.0
    %970 = vmatpush.msra.mxu0 0.0
    %971 = vmatpush.msra.mxu0 0.0
    %972 = vmatpush.msra.mxu0 0.0
    %973 = vmatpush.msra.mxu0 0.0
    %974 = vmatpush.msra.mxu0 %v433
    %975 = vmatpush.msra.mxu0 %v431
    %976 = vmatpush.msra.mxu0 %v429
    %977 = vmatpush.msra.mxu0 %v427
    %978 = vmatpush.msra.mxu0 %v425
    %979 = vmatpush.msra.mxu0 %v423
    %980 = vmatpush.msra.mxu0 %v421
    %981 = vmatpush.msra.mxu0 %v419
    %982 = vmatmul.f32.gmra.mxu0 %v964
    %v983 = vpop.f32.mrf.mxu0
    %v984 = vadd.f32 0.0, %v983
    %985 = vdwg.mxu0
    %986 = vmatpush.msra.mxu0 0.0
    %987 = vmatpush.msra.mxu0 0.0
    %988 = vmatpush.msra.mxu0 0.0
    %989 = vmatpush.msra.mxu0 0.0
    %990 = vmatpush.msra.mxu0 0.0
    %991 = vmatpush.msra.mxu0 0.0
    %992 = vmatpush.msra.mxu0 0.0
    %993 = vmatpush.msra.mxu0 0.0
    %994 = vmatpush.msra.mxu0 %v434
    %995 = vmatpush.msra.mxu0 %v432
    %996 = vmatpush.msra.mxu0 %v430
    %997 = vmatpush.msra.mxu0 %v428
    %998 = vmatpush.msra.mxu0 %v426
    %999 = vmatpush.msra.mxu0 %v424
    %1000 = vmatpush.msra.mxu0 %v422
    %1001 = vmatpush.msra.mxu0 %v420
    %1002 = vmatmul.f32.gmra.mxu0 %v964
    %v1003 = vpop.f32.mrf.mxu0
    %v1004 = vadd.f32 0.0, %v1003
    %1005 = vdwg.mxu0
    %s1006 = scalar_lea.vmem [#allocation2], 16
    %v1007 = vld [vmem:[%s1006] sm:$0xf]
    %v1010 = vrot.slane %v900, 6
    %v1011 = vsel %vm205, %v880, %v1010
    %v1013 = vadd.f32 %v1007, %v1011
    %v1014 = vmul.f32 %v1013, %v259
    %v1015 = vtanh.pop %v1014
    %1017 = vst [vmem:[#allocation1] ss:$4 sm:$0xff] %v1015
    %v1018 = vld.sshfl [vmem:[#allocation1] sm:$0xff pattern:$0x73625140]
    %v1019 = vld.sshfl [vmem:[#allocation1 + $0x8] sm:$0xff pattern:$0x73625140]
    %v1022 = vmul.f32 %v250, %v1018
    %v1023 = vmul.f32 %v251, %v1019
    %v1024 = vadd.f32 %v252, %v1022
    %v1025 = vadd.f32 %v253, %v1023
    %v1026 = vmul.f32 %v1024, %v856
    %v1027 = vmul.f32 %v1024, %v1025
    %1029 = vrot.lane.b32.xlu0 %v1027, 64
    %v1030 = vpop.permute.xlu0 %1029
    %v1032 = vadd.f32 %v1026, %v1030
    %v1033 = vtanh.pop %v1032
    %v1034 = vmul.f32 %v1025, %v1033
    %v1036 = vsel %vm314, %v1034, 0
    %1038 = vmatpush.msra.mxu0 0.0
    %1039 = vmatpush.msra.mxu0 0.0
    %1040 = vmatpush.msra.mxu0 0.0
    %1041 = vmatpush.msra.mxu0 0.0
    %1042 = vmatpush.msra.mxu0 0.0
    %1043 = vmatpush.msra.mxu0 0.0
    %1044 = vmatpush.msra.mxu0 0.0
    %1045 = vmatpush.msra.mxu0 0.0
    %1046 = vmatpush.msra.mxu0 %v310
    %1047 = vmatpush.msra.mxu0 %v306
    %1048 = vmatpush.msra.mxu0 %v302
    %1049 = vmatpush.msra.mxu0 %v298
    %1050 = vmatpush.msra.mxu0 %v294
    %1051 = vmatpush.msra.mxu0 %v290
    %1052 = vmatpush.msra.mxu0 %v286
    %1053 = vmatpush.msra.mxu0 %v282
    %1054 = vmatmul.f32.gmra.mxu0 %v1036
    %v1055 = vpop.f32.mrf.mxu0
    %v1056 = vadd.f32 0.0, %v1055
    %1057 = vdwg.mxu0
    %1058 = vmatpush.msra.mxu0 0.0
    %1059 = vmatpush.msra.mxu0 0.0
    %1060 = vmatpush.msra.mxu0 0.0
    %1061 = vmatpush.msra.mxu0 0.0
    %1062 = vmatpush.msra.mxu0 0.0
    %1063 = vmatpush.msra.mxu0 0.0
    %1064 = vmatpush.msra.mxu0 0.0
    %1065 = vmatpush.msra.mxu0 0.0
    %1066 = vmatpush.msra.mxu0 %v311
    %1067 = vmatpush.msra.mxu0 %v307
    %1068 = vmatpush.msra.mxu0 %v303
    %1069 = vmatpush.msra.mxu0 %v299
    %1070 = vmatpush.msra.mxu0 %v295
    %1071 = vmatpush.msra.mxu0 %v291
    %1072 = vmatpush.msra.mxu0 %v287
    %1073 = vmatpush.msra.mxu0 %v283
    %1074 = vmatmul.f32.gmra.mxu0 %v1036
    %v1075 = vpop.f32.mrf.mxu0
    %v1076 = vadd.f32 0.0, %v1075
    %1077 = vdwg.mxu0
    %1078 = vmatpush.msra.mxu0 0.0
    %1079 = vmatpush.msra.mxu0 0.0
    %1080 = vmatpush.msra.mxu0 0.0
    %1081 = vmatpush.msra.mxu0 0.0
    %1082 = vmatpush.msra.mxu0 0.0
    %1083 = vmatpush.msra.mxu0 0.0
    %1084 = vmatpush.msra.mxu0 0.0
    %1085 = vmatpush.msra.mxu0 0.0
    %1086 = vmatpush.msra.mxu0 %v312
    %1087 = vmatpush.msra.mxu0 %v308
    %1088 = vmatpush.msra.mxu0 %v304
    %1089 = vmatpush.msra.mxu0 %v300
    %1090 = vmatpush.msra.mxu0 %v296
    %1091 = vmatpush.msra.mxu0 %v292
    %1092 = vmatpush.msra.mxu0 %v288
    %1093 = vmatpush.msra.mxu0 %v284
    %1094 = vmatmul.f32.gmra.mxu0 %v1036
    %v1095 = vpop.f32.mrf.mxu0
    %v1096 = vadd.f32 0.0, %v1095
    %1097 = vdwg.mxu0
    %1098 = vmatpush.msra.mxu0 0.0
    %1099 = vmatpush.msra.mxu0 0.0
    %1100 = vmatpush.msra.mxu0 0.0
    %1101 = vmatpush.msra.mxu0 0.0
    %1102 = vmatpush.msra.mxu0 0.0
    %1103 = vmatpush.msra.mxu0 0.0
    %1104 = vmatpush.msra.mxu0 0.0
    %1105 = vmatpush.msra.mxu0 0.0
    %1106 = vmatpush.msra.mxu0 %v313
    %1107 = vmatpush.msra.mxu0 %v309
    %1108 = vmatpush.msra.mxu0 %v305
    %1109 = vmatpush.msra.mxu0 %v301
    %1110 = vmatpush.msra.mxu0 %v297
    %1111 = vmatpush.msra.mxu0 %v293
    %1112 = vmatpush.msra.mxu0 %v289
    %1113 = vmatpush.msra.mxu0 %v285
    %1114 = vmatmul.f32.gmra.mxu0 %v1036
    %v1115 = vpop.f32.mrf.mxu0
    %v1116 = vadd.f32 0.0, %v1115
    %1117 = vdwg.mxu0
    %v1118 = vadd.f32 %v1096, %v984
    %v1119 = vadd.f32 %v1116, %v1004
    %v1120 = vadd.f32 %v1118, %v241
    %v1121 = vadd.f32 %v1119, %v242
    %v1122 = vmul.f32 %v1120, %v250
    %v1123 = vmul.f32 %v1121, %v251
    %v1124 = vtanh.pop %v1122
    %v1125 = vtanh.pop %v1123
    %v1126 = vmul.f32 %v250, %v1124
    %v1127 = vmul.f32 %v251, %v1125
    %v1128 = vadd.f32 %v252, %v1126
    %v1129 = vadd.f32 %v253, %v1127
    %v1130 = vmul.f32 %v1128, %v960
    %v1131 = vmul.f32 %v1128, %v1129
    %1133 = vrot.lane.b32.xlu0 %v1131, 64
    %v1134 = vpop.permute.xlu0 %1133
    %v1136 = vadd.f32 %v1130, %v1134
    %v1137 = vtanh.pop %v1136
    %v1138 = vmul.f32 %v1129, %v1137
    %v1140 = vsel %vm314, %v1138, 0
    %1142 = vmatpush.msra.mxu0 0.0
    %1143 = vmatpush.msra.mxu0 0.0
    %1144 = vmatpush.msra.mxu0 0.0
    %1145 = vmatpush.msra.mxu0 0.0
    %1146 = vmatpush.msra.mxu0 0.0
    %1147 = vmatpush.msra.mxu0 0.0
    %1148 = vmatpush.msra.mxu0 0.0
    %1149 = vmatpush.msra.mxu0 0.0
    %1150 = vmatpush.msra.mxu0 %v433
    %1151 = vmatpush.msra.mxu0 %v431
    %1152 = vmatpush.msra.mxu0 %v429
    %1153 = vmatpush.msra.mxu0 %v427
    %1154 = vmatpush.msra.mxu0 %v425
    %1155 = vmatpush.msra.mxu0 %v423
    %1156 = vmatpush.msra.mxu0 %v421
    %1157 = vmatpush.msra.mxu0 %v419
    %1158 = vmatmul.f32.gmra.mxu0 %v1140
    %v1159 = vpop.f32.mrf.mxu0
    %v1160 = vadd.f32 0.0, %v1159
    %1161 = vdwg.mxu0
    %1162 = vmatpush.msra.mxu0 0.0
    %1163 = vmatpush.msra.mxu0 0.0
    %1164 = vmatpush.msra.mxu0 0.0
    %1165 = vmatpush.msra.mxu0 0.0
    %1166 = vmatpush.msra.mxu0 0.0
    %1167 = vmatpush.msra.mxu0 0.0
    %1168 = vmatpush.msra.mxu0 0.0
    %1169 = vmatpush.msra.mxu0 0.0
    %1170 = vmatpush.msra.mxu0 %v434
    %1171 = vmatpush.msra.mxu0 %v432
    %1172 = vmatpush.msra.mxu0 %v430
    %1173 = vmatpush.msra.mxu0 %v428
    %1174 = vmatpush.msra.mxu0 %v426
    %1175 = vmatpush.msra.mxu0 %v424
    %1176 = vmatpush.msra.mxu0 %v422
    %1177 = vmatpush.msra.mxu0 %v420
    %1178 = vmatmul.f32.gmra.mxu0 %v1140
    %v1179 = vpop.f32.mrf.mxu0
    %v1180 = vadd.f32 0.0, %v1179
    %1181 = vdwg.mxu0
    %s1182 = scalar_lea.vmem [#allocation2], 20
    %v1183 = vld [vmem:[%s1182] sm:$0xf]
    %v1186 = vrot.slane %v1076, 6
    %v1187 = vsel %vm205, %v1056, %v1186
    %v1189 = vadd.f32 %v1183, %v1187
    %v1190 = vmul.f32 %v1189, %v259
    %v1191 = vtanh.pop %v1190
    %1193 = vst [vmem:[#allocation1] ss:$4 sm:$0xff] %v1191
    %v1194 = vld.sshfl [vmem:[#allocation1] sm:$0xff pattern:$0x73625140]
    %v1195 = vld.sshfl [vmem:[#allocation1 + $0x8] sm:$0xff pattern:$0x73625140]
    %v1198 = vmul.f32 %v250, %v1194
    %v1199 = vmul.f32 %v251, %v1195
    %v1200 = vadd.f32 %v252, %v1198
    %v1201 = vadd.f32 %v253, %v1199
    %v1202 = vmul.f32 %v1200, %v1032
    %v1203 = vmul.f32 %v1200, %v1201
    %1205 = vrot.lane.b32.xlu0 %v1203, 64
    %v1206 = vpop.permute.xlu0 %1205
    %v1208 = vadd.f32 %v1202, %v1206
    %v1209 = vtanh.pop %v1208
    %v1210 = vmul.f32 %v1201, %v1209
    %v1212 = vsel %vm314, %v1210, 0
    %1214 = vmatpush.msra.mxu0 0.0
    %1215 = vmatpush.msra.mxu0 0.0
    %1216 = vmatpush.msra.mxu0 0.0
    %1217 = vmatpush.msra.mxu0 0.0
    %1218 = vmatpush.msra.mxu0 0.0
    %1219 = vmatpush.msra.mxu0 0.0
    %1220 = vmatpush.msra.mxu0 0.0
    %1221 = vmatpush.msra.mxu0 0.0
    %1222 = vmatpush.msra.mxu0 %v310
    %1223 = vmatpush.msra.mxu0 %v306
    %1224 = vmatpush.msra.mxu0 %v302
    %1225 = vmatpush.msra.mxu0 %v298
    %1226 = vmatpush.msra.mxu0 %v294
    %1227 = vmatpush.msra.mxu0 %v290
    %1228 = vmatpush.msra.mxu0 %v286
    %1229 = vmatpush.msra.mxu0 %v282
    %1230 = vmatmul.f32.gmra.mxu0 %v1212
    %v1231 = vpop.f32.mrf.mxu0
    %v1232 = vadd.f32 0.0, %v1231
    %1233 = vdwg.mxu0
    %1234 = vmatpush.msra.mxu0 0.0
    %1235 = vmatpush.msra.mxu0 0.0
    %1236 = vmatpush.msra.mxu0 0.0
    %1237 = vmatpush.msra.mxu0 0.0
    %1238 = vmatpush.msra.mxu0 0.0
    %1239 = vmatpush.msra.mxu0 0.0
    %1240 = vmatpush.msra.mxu0 0.0
    %1241 = vmatpush.msra.mxu0 0.0
    %1242 = vmatpush.msra.mxu0 %v311
    %1243 = vmatpush.msra.mxu0 %v307
    %1244 = vmatpush.msra.mxu0 %v303
    %1245 = vmatpush.msra.mxu0 %v299
    %1246 = vmatpush.msra.mxu0 %v295
    %1247 = vmatpush.msra.mxu0 %v291
    %1248 = vmatpush.msra.mxu0 %v287
    %1249 = vmatpush.msra.mxu0 %v283
    %1250 = vmatmul.f32.gmra.mxu0 %v1212
    %v1251 = vpop.f32.mrf.mxu0
    %v1252 = vadd.f32 0.0, %v1251
    %1253 = vdwg.mxu0
    %1254 = vmatpush.msra.mxu0 0.0
    %1255 = vmatpush.msra.mxu0 0.0
    %1256 = vmatpush.msra.mxu0 0.0
    %1257 = vmatpush.msra.mxu0 0.0
    %1258 = vmatpush.msra.mxu0 0.0
    %1259 = vmatpush.msra.mxu0 0.0
    %1260 = vmatpush.msra.mxu0 0.0
    %1261 = vmatpush.msra.mxu0 0.0
    %1262 = vmatpush.msra.mxu0 %v312
    %1263 = vmatpush.msra.mxu0 %v308
    %1264 = vmatpush.msra.mxu0 %v304
    %1265 = vmatpush.msra.mxu0 %v300
    %1266 = vmatpush.msra.mxu0 %v296
    %1267 = vmatpush.msra.mxu0 %v292
    %1268 = vmatpush.msra.mxu0 %v288
    %1269 = vmatpush.msra.mxu0 %v284
    %1270 = vmatmul.f32.gmra.mxu0 %v1212
    %v1271 = vpop.f32.mrf.mxu0
    %v1272 = vadd.f32 0.0, %v1271
    %1273 = vdwg.mxu0
    %1274 = vmatpush.msra.mxu0 0.0
    %1275 = vmatpush.msra.mxu0 0.0
    %1276 = vmatpush.msra.mxu0 0.0
    %1277 = vmatpush.msra.mxu0 0.0
    %1278 = vmatpush.msra.mxu0 0.0
    %1279 = vmatpush.msra.mxu0 0.0
    %1280 = vmatpush.msra.mxu0 0.0
    %1281 = vmatpush.msra.mxu0 0.0
    %1282 = vmatpush.msra.mxu0 %v313
    %1283 = vmatpush.msra.mxu0 %v309
    %1284 = vmatpush.msra.mxu0 %v305
    %1285 = vmatpush.msra.mxu0 %v301
    %1286 = vmatpush.msra.mxu0 %v297
    %1287 = vmatpush.msra.mxu0 %v293
    %1288 = vmatpush.msra.mxu0 %v289
    %1289 = vmatpush.msra.mxu0 %v285
    %1290 = vmatmul.f32.gmra.mxu0 %v1212
    %v1291 = vpop.f32.mrf.mxu0
    %v1292 = vadd.f32 0.0, %v1291
    %1293 = vdwg.mxu0
    %v1294 = vadd.f32 %v1272, %v1160
    %v1295 = vadd.f32 %v1292, %v1180
    %v1296 = vadd.f32 %v1294, %v241
    %v1297 = vadd.f32 %v1295, %v242
    %v1298 = vmul.f32 %v1296, %v250
    %v1299 = vmul.f32 %v1297, %v251
    %v1300 = vtanh.pop %v1298
    %v1301 = vtanh.pop %v1299
    %v1302 = vmul.f32 %v250, %v1300
    %v1303 = vmul.f32 %v251, %v1301
    %v1304 = vadd.f32 %v252, %v1302
    %v1305 = vadd.f32 %v253, %v1303
    %v1306 = vmul.f32 %v1304, %v1136
    %v1307 = vmul.f32 %v1304, %v1305
    %1309 = vrot.lane.b32.xlu0 %v1307, 64
    %v1310 = vpop.permute.xlu0 %1309
    %v1312 = vadd.f32 %v1306, %v1310
    %v1313 = vtanh.pop %v1312
    %v1314 = vmul.f32 %v1305, %v1313
    %v1316 = vsel %vm314, %v1314, 0
    %1318 = vmatpush.msra.mxu0 0.0
    %1319 = vmatpush.msra.mxu0 0.0
    %1320 = vmatpush.msra.mxu0 0.0
    %1321 = vmatpush.msra.mxu0 0.0
    %1322 = vmatpush.msra.mxu0 0.0
    %1323 = vmatpush.msra.mxu0 0.0
    %1324 = vmatpush.msra.mxu0 0.0
    %1325 = vmatpush.msra.mxu0 0.0
    %1326 = vmatpush.msra.mxu0 %v433
    %1327 = vmatpush.msra.mxu0 %v431
    %1328 = vmatpush.msra.mxu0 %v429
    %1329 = vmatpush.msra.mxu0 %v427
    %1330 = vmatpush.msra.mxu0 %v425
    %1331 = vmatpush.msra.mxu0 %v423
    %1332 = vmatpush.msra.mxu0 %v421
    %1333 = vmatpush.msra.mxu0 %v419
    %1334 = vmatmul.f32.gmra.mxu0 %v1316
    %v1335 = vpop.f32.mrf.mxu0
    %v1336 = vadd.f32 0.0, %v1335
    %1337 = vdwg.mxu0
    %1338 = vmatpush.msra.mxu0 0.0
    %1339 = vmatpush.msra.mxu0 0.0
    %1340 = vmatpush.msra.mxu0 0.0
    %1341 = vmatpush.msra.mxu0 0.0
    %1342 = vmatpush.msra.mxu0 0.0
    %1343 = vmatpush.msra.mxu0 0.0
    %1344 = vmatpush.msra.mxu0 0.0
    %1345 = vmatpush.msra.mxu0 0.0
    %1346 = vmatpush.msra.mxu0 %v434
    %1347 = vmatpush.msra.mxu0 %v432
    %1348 = vmatpush.msra.mxu0 %v430
    %1349 = vmatpush.msra.mxu0 %v428
    %1350 = vmatpush.msra.mxu0 %v426
    %1351 = vmatpush.msra.mxu0 %v424
    %1352 = vmatpush.msra.mxu0 %v422
    %1353 = vmatpush.msra.mxu0 %v420
    %1354 = vmatmul.f32.gmra.mxu0 %v1316
    %v1355 = vpop.f32.mrf.mxu0
    %v1356 = vadd.f32 0.0, %v1355
    %1357 = vdwg.mxu0
    %s1358 = scalar_lea.vmem [#allocation2], 24
    %v1359 = vld [vmem:[%s1358] sm:$0xf]
    %v1362 = vrot.slane %v1252, 6
    %v1363 = vsel %vm205, %v1232, %v1362
    %v1365 = vadd.f32 %v1359, %v1363
    %v1366 = vmul.f32 %v1365, %v259
    %v1367 = vtanh.pop %v1366
    %1369 = vst [vmem:[#allocation1] ss:$4 sm:$0xff] %v1367
    %v1370 = vld.sshfl [vmem:[#allocation1] sm:$0xff pattern:$0x73625140]
    %v1371 = vld.sshfl [vmem:[#allocation1 + $0x8] sm:$0xff pattern:$0x73625140]
    %v1374 = vmul.f32 %v250, %v1370
    %v1375 = vmul.f32 %v251, %v1371
    %v1376 = vadd.f32 %v252, %v1374
    %v1377 = vadd.f32 %v253, %v1375
    %v1378 = vmul.f32 %v1376, %v1208
    %v1379 = vmul.f32 %v1376, %v1377
    %1381 = vrot.lane.b32.xlu0 %v1379, 64
    %v1382 = vpop.permute.xlu0 %1381
    %v1384 = vadd.f32 %v1378, %v1382
    %v1385 = vtanh.pop %v1384
    %v1386 = vmul.f32 %v1377, %v1385
    %v1388 = vsel %vm314, %v1386, 0
    %1390 = vmatpush.msra.mxu0 0.0
    %1391 = vmatpush.msra.mxu0 0.0
    %1392 = vmatpush.msra.mxu0 0.0
    %1393 = vmatpush.msra.mxu0 0.0
    %1394 = vmatpush.msra.mxu0 0.0
    %1395 = vmatpush.msra.mxu0 0.0
    %1396 = vmatpush.msra.mxu0 0.0
    %1397 = vmatpush.msra.mxu0 0.0
    %1398 = vmatpush.msra.mxu0 %v310
    %1399 = vmatpush.msra.mxu0 %v306
    %1400 = vmatpush.msra.mxu0 %v302
    %1401 = vmatpush.msra.mxu0 %v298
    %1402 = vmatpush.msra.mxu0 %v294
    %1403 = vmatpush.msra.mxu0 %v290
    %1404 = vmatpush.msra.mxu0 %v286
    %1405 = vmatpush.msra.mxu0 %v282
    %1406 = vmatmul.f32.gmra.mxu0 %v1388
    %v1407 = vpop.f32.mrf.mxu0
    %v1408 = vadd.f32 0.0, %v1407
    %1409 = vdwg.mxu0
    %1410 = vmatpush.msra.mxu0 0.0
    %1411 = vmatpush.msra.mxu0 0.0
    %1412 = vmatpush.msra.mxu0 0.0
    %1413 = vmatpush.msra.mxu0 0.0
    %1414 = vmatpush.msra.mxu0 0.0
    %1415 = vmatpush.msra.mxu0 0.0
    %1416 = vmatpush.msra.mxu0 0.0
    %1417 = vmatpush.msra.mxu0 0.0
    %1418 = vmatpush.msra.mxu0 %v311
    %1419 = vmatpush.msra.mxu0 %v307
    %1420 = vmatpush.msra.mxu0 %v303
    %1421 = vmatpush.msra.mxu0 %v299
    %1422 = vmatpush.msra.mxu0 %v295
    %1423 = vmatpush.msra.mxu0 %v291
    %1424 = vmatpush.msra.mxu0 %v287
    %1425 = vmatpush.msra.mxu0 %v283
    %1426 = vmatmul.f32.gmra.mxu0 %v1388
    %v1427 = vpop.f32.mrf.mxu0
    %v1428 = vadd.f32 0.0, %v1427
    %1429 = vdwg.mxu0
    %1430 = vmatpush.msra.mxu0 0.0
    %1431 = vmatpush.msra.mxu0 0.0
    %1432 = vmatpush.msra.mxu0 0.0
    %1433 = vmatpush.msra.mxu0 0.0
    %1434 = vmatpush.msra.mxu0 0.0
    %1435 = vmatpush.msra.mxu0 0.0
    %1436 = vmatpush.msra.mxu0 0.0
    %1437 = vmatpush.msra.mxu0 0.0
    %1438 = vmatpush.msra.mxu0 %v312
    %1439 = vmatpush.msra.mxu0 %v308
    %1440 = vmatpush.msra.mxu0 %v304
    %1441 = vmatpush.msra.mxu0 %v300
    %1442 = vmatpush.msra.mxu0 %v296
    %1443 = vmatpush.msra.mxu0 %v292
    %1444 = vmatpush.msra.mxu0 %v288
    %1445 = vmatpush.msra.mxu0 %v284
    %1446 = vmatmul.f32.gmra.mxu0 %v1388
    %v1447 = vpop.f32.mrf.mxu0
    %v1448 = vadd.f32 0.0, %v1447
    %1449 = vdwg.mxu0
    %1450 = vmatpush.msra.mxu0 0.0
    %1451 = vmatpush.msra.mxu0 0.0
    %1452 = vmatpush.msra.mxu0 0.0
    %1453 = vmatpush.msra.mxu0 0.0
    %1454 = vmatpush.msra.mxu0 0.0
    %1455 = vmatpush.msra.mxu0 0.0
    %1456 = vmatpush.msra.mxu0 0.0
    %1457 = vmatpush.msra.mxu0 0.0
    %1458 = vmatpush.msra.mxu0 %v313
    %1459 = vmatpush.msra.mxu0 %v309
    %1460 = vmatpush.msra.mxu0 %v305
    %1461 = vmatpush.msra.mxu0 %v301
    %1462 = vmatpush.msra.mxu0 %v297
    %1463 = vmatpush.msra.mxu0 %v293
    %1464 = vmatpush.msra.mxu0 %v289
    %1465 = vmatpush.msra.mxu0 %v285
    %1466 = vmatmul.f32.gmra.mxu0 %v1388
    %v1467 = vpop.f32.mrf.mxu0
    %v1468 = vadd.f32 0.0, %v1467
    %1469 = vdwg.mxu0
    %v1470 = vadd.f32 %v1448, %v1336
    %v1471 = vadd.f32 %v1468, %v1356
    %v1472 = vadd.f32 %v1470, %v241
    %v1473 = vadd.f32 %v1471, %v242
    %v1474 = vmul.f32 %v1472, %v250
    %v1475 = vmul.f32 %v1473, %v251
    %v1476 = vtanh.pop %v1474
    %v1477 = vtanh.pop %v1475
    %v1478 = vmul.f32 %v250, %v1476
    %v1479 = vmul.f32 %v251, %v1477
    %v1480 = vadd.f32 %v252, %v1478
    %v1481 = vadd.f32 %v253, %v1479
    %v1482 = vmul.f32 %v1480, %v1312
    %v1483 = vmul.f32 %v1480, %v1481
    %1485 = vrot.lane.b32.xlu0 %v1483, 64
    %v1486 = vpop.permute.xlu0 %1485
    %v1488 = vadd.f32 %v1482, %v1486
    %v1489 = vtanh.pop %v1488
    %v1490 = vmul.f32 %v1481, %v1489
    %v1492 = vsel %vm314, %v1490, 0
    %1494 = vmatpush.msra.mxu0 0.0
    %1495 = vmatpush.msra.mxu0 0.0
    %1496 = vmatpush.msra.mxu0 0.0
    %1497 = vmatpush.msra.mxu0 0.0
    %1498 = vmatpush.msra.mxu0 0.0
    %1499 = vmatpush.msra.mxu0 0.0
    %1500 = vmatpush.msra.mxu0 0.0
    %1501 = vmatpush.msra.mxu0 0.0
    %1502 = vmatpush.msra.mxu0 %v433
    %1503 = vmatpush.msra.mxu0 %v431
    %1504 = vmatpush.msra.mxu0 %v429
    %1505 = vmatpush.msra.mxu0 %v427
    %1506 = vmatpush.msra.mxu0 %v425
    %1507 = vmatpush.msra.mxu0 %v423
    %1508 = vmatpush.msra.mxu0 %v421
    %1509 = vmatpush.msra.mxu0 %v419
    %1510 = vmatmul.f32.gmra.mxu0 %v1492
    %v1511 = vpop.f32.mrf.mxu0
    %v1512 = vadd.f32 0.0, %v1511
    %1513 = vdwg.mxu0
    %1514 = vmatpush.msra.mxu0 0.0
    %1515 = vmatpush.msra.mxu0 0.0
    %1516 = vmatpush.msra.mxu0 0.0
    %1517 = vmatpush.msra.mxu0 0.0
    %1518 = vmatpush.msra.mxu0 0.0
    %1519 = vmatpush.msra.mxu0 0.0
    %1520 = vmatpush.msra.mxu0 0.0
    %1521 = vmatpush.msra.mxu0 0.0
    %1522 = vmatpush.msra.mxu0 %v434
    %1523 = vmatpush.msra.mxu0 %v432
    %1524 = vmatpush.msra.mxu0 %v430
    %1525 = vmatpush.msra.mxu0 %v428
    %1526 = vmatpush.msra.mxu0 %v426
    %1527 = vmatpush.msra.mxu0 %v424
    %1528 = vmatpush.msra.mxu0 %v422
    %1529 = vmatpush.msra.mxu0 %v420
    %1530 = vmatmul.f32.gmra.mxu0 %v1492
    %v1531 = vpop.f32.mrf.mxu0
    %v1532 = vadd.f32 0.0, %v1531
    %1533 = vdwg.mxu0
    %s1534 = scalar_lea.vmem [#allocation2], 28
    %v1535 = vld [vmem:[%s1534] sm:$0xf]
    %v1538 = vrot.slane %v1428, 6
    %v1539 = vsel %vm205, %v1408, %v1538
    %v1541 = vadd.f32 %v1535, %v1539
    %v1542 = vmul.f32 %v1541, %v259
    %v1543 = vtanh.pop %v1542
    %1545 = vst [vmem:[#allocation1] ss:$4 sm:$0xff] %v1543
    %v1546 = vld.sshfl [vmem:[#allocation1] sm:$0xff pattern:$0x73625140]
    %v1547 = vld.sshfl [vmem:[#allocation1 + $0x8] sm:$0xff pattern:$0x73625140]
    %v1550 = vmul.f32 %v250, %v1546
    %v1551 = vmul.f32 %v251, %v1547
    %v1552 = vadd.f32 %v252, %v1550
    %v1553 = vadd.f32 %v253, %v1551
    %v1554 = vmul.f32 %v1552, %v1384
    %v1555 = vmul.f32 %v1552, %v1553
    %1557 = vrot.lane.b32.xlu0 %v1555, 64
    %v1558 = vpop.permute.xlu0 %1557
    %v1560 = vadd.f32 %v1554, %v1558
    %v1561 = vtanh.pop %v1560
    %v1562 = vmul.f32 %v1553, %v1561
    %v1564 = vsel %vm314, %v1562, 0
    %1566 = vmatpush.msra.mxu0 0.0
    %1567 = vmatpush.msra.mxu0 0.0
    %1568 = vmatpush.msra.mxu0 0.0
    %1569 = vmatpush.msra.mxu0 0.0
    %1570 = vmatpush.msra.mxu0 0.0
    %1571 = vmatpush.msra.mxu0 0.0
    %1572 = vmatpush.msra.mxu0 0.0
    %1573 = vmatpush.msra.mxu0 0.0
    %1574 = vmatpush.msra.mxu0 %v312
    %1575 = vmatpush.msra.mxu0 %v308
    %1576 = vmatpush.msra.mxu0 %v304
    %1577 = vmatpush.msra.mxu0 %v300
    %1578 = vmatpush.msra.mxu0 %v296
    %1579 = vmatpush.msra.mxu0 %v292
    %1580 = vmatpush.msra.mxu0 %v288
    %1581 = vmatpush.msra.mxu0 %v284
    %1582 = vmatmul.f32.gmra.mxu0 %v1564
    %v1583 = vpop.f32.mrf.mxu0
    %v1584 = vadd.f32 0.0, %v1583
    %1585 = vdwg.mxu0
    %1586 = vmatpush.msra.mxu0 0.0
    %1587 = vmatpush.msra.mxu0 0.0
    %1588 = vmatpush.msra.mxu0 0.0
    %1589 = vmatpush.msra.mxu0 0.0
    %1590 = vmatpush.msra.mxu0 0.0
    %1591 = vmatpush.msra.mxu0 0.0
    %1592 = vmatpush.msra.mxu0 0.0
    %1593 = vmatpush.msra.mxu0 0.0
    %1594 = vmatpush.msra.mxu0 %v313
    %1595 = vmatpush.msra.mxu0 %v309
    %1596 = vmatpush.msra.mxu0 %v305
    %1597 = vmatpush.msra.mxu0 %v301
    %1598 = vmatpush.msra.mxu0 %v297
    %1599 = vmatpush.msra.mxu0 %v293
    %1600 = vmatpush.msra.mxu0 %v289
    %1601 = vmatpush.msra.mxu0 %v285
    %1602 = vmatmul.f32.gmra.mxu0 %v1564
    %v1603 = vpop.f32.mrf.mxu0
    %v1604 = vadd.f32 0.0, %v1603
    %1605 = vdwg.mxu0
    %v1606 = vadd.f32 %v1584, %v1512
    %v1607 = vadd.f32 %v1604, %v1532
    %v1608 = vadd.f32 %v1606, %v241
    %v1609 = vadd.f32 %v1607, %v242
    %v1610 = vmul.f32 %v1608, %v250
    %v1611 = vmul.f32 %v1609, %v251
    %v1612 = vtanh.pop %v1610
    %v1613 = vtanh.pop %v1611
    %v1614 = vmul.f32 %v250, %v1612
    %v1615 = vmul.f32 %v251, %v1613
    %v1616 = vadd.f32 %v252, %v1614
    %v1617 = vadd.f32 %v253, %v1615
    %v1618 = vmul.f32 %v1616, %v1488
    %v1619 = vmul.f32 %v1616, %v1617
    %1621 = vrot.lane.b32.xlu0 %v1619, 64
    %v1622 = vpop.permute.xlu0 %1621
    %v1624 = vadd.f32 %v1618, %v1622
    %v1625 = vtanh.pop %v1624
    %v1626 = vmul.f32 %v1617, %v1625
    %v1627 = vld [vmem:[%s8] sm:$0x1]
    %v1629 = vperm.slane %v1627, 0
    %v1631 = vmul.f32 %v1626, %v1629
    %vm1632 = vcmask 517120
    %v1633 = vsel %vm1632, %v1631, 0.0
    %1634 = vadd.xlane.f32.xlu0 %v1633
    %v1635 = vpop.xlane.xlu0 %1634
    %v1636 = vld [vmem:[#allocation3] sm:$0x1]
    %v1638 = vperm.slane %v1636, 0
    %v1640 = vadd.f32 %v1635, %v1638
    %vm1641 = vcmask 1024
    %1642 = vst.msk [vmem:[%s10] sm:$0x3] %vm1641, %v1640
    // Predicated region
    $region46: #{conv_lstm_forward.1} parent=1 // pred_check
      _
    $region47: #{conv_lstm_forward.1} parent=1 // pred_check_branch
      %1644 = sbr.rel (0) target = $region49
    $region48: #{conv_lstm_forward.1} parent=1 // pred_region
      _
    $region49: #{conv_lstm_forward.1} parent=1 // pred_fallthru
      _
    // Predicated region
    $region50: #{conv_lstm_forward.1} parent=1 // pred_check
      _
    $region51: #{conv_lstm_forward.1} parent=1 // pred_check_branch
      %1646 = sbr.rel (0) target = $region53
    $region52: #{conv_lstm_forward.1} parent=1 // pred_region
      _
    $region53: #{conv_lstm_forward.1} parent=1 // pred_fallthru
      _
    %1647 = vsyncpa [#allocation5], 1

</llo_original>
